<compile_context>
chip_gen: v7x
topology: tpu7x:2x2x1
jax: 0.10.0
libtpu: 0.0.40
codegen_flags: <defaults>
</compile_context>

<pallas_src>
from functools import partial

import jax
import jax.numpy as jnp
from jax import lax
from jax.experimental import pallas as pl
from jax.experimental.pallas import tpu as pltpu


def _flash_attention_kernel(xq_ref, xkv_ref, gamma_ref, wqn_ref, wkt_ref,
                            wv_ref, wo_ref, nullv_ref, o_ref,
                            q_sc, m_sc, l_sc, acc_sc,
                            *, heads, dim_head, softmax_exp_dtype):
    H = heads * dim_head
    ki = pl.program_id(2)
    nkv = pl.num_programs(2)
    gamma = gamma_ref[...]                                    # (1, D), sqrt(D) folded in

    def rmsnorm_bf16(x):
        # F.normalize(x, dim=-1) * sqrt(D) * gamma, rsqrt on the EUP.
        ssq = jnp.sum(x * x, axis=-1, keepdims=True)
        return (x * lax.rsqrt(jnp.maximum(ssq, 1e-24)) * gamma).astype(jnp.bfloat16)

    # ---- query-side work: once per (batch, q-tile); cached across the KV axis.
    @pl.when(ki == 0)
    def _init():
        xqb = rmsnorm_bf16(xq_ref[...])                       # (tq, D) bf16
        # Fused projection: [Wq*scale | (Wq*scale)@null_k] -> q + null-key scores.
        qn = jnp.dot(xqb, wqn_ref[...], preferred_element_type=jnp.float32)
        q_sc[...] = qn[:, :H].astype(jnp.bfloat16)            # (tq, H)
        # Online-softmax state seeded with the null key/value:
        #   m = s_null, l = exp(s_null - m) = 1, acc = 1 * null_v
        m_sc[...] = qn[:, H:]                                  # (tq, heads)
        l_sc[...] = jnp.ones(l_sc.shape, l_sc.dtype)
        acc_sc[...] = jnp.broadcast_to(nullv_ref[...], acc_sc.shape)

    # ---- KV-side work: every KV tile. ---------------------------------------
    xkb = rmsnorm_bf16(xkv_ref[...])                           # (tk, D) bf16
    # V in row layout (tk, H).
    v_bf = jnp.dot(xkb, wv_ref[...],
                   preferred_element_type=jnp.float32).astype(jnp.bfloat16)
    # K directly in transposed layout (H, tk): one full-width contraction per
    # tile instead of `heads` sub-128-lane transposes inside the head loop.
    kT_bf = jnp.einsum('hd,nd->hn', wkt_ref[...], xkb,
                       preferred_element_type=jnp.float32).astype(jnp.bfloat16)

    for h in range(heads):                                     # heads is small: unrolled
        sl = slice(h * dim_head, (h + 1) * dim_head)
        qh = q_sc[:, sl]                                       # (tq, dh) bf16
        s = jnp.dot(qh, kT_bf[sl, :],
                    preferred_element_type=jnp.float32)        # (tq, tk) f32

        m_prev = m_sc[:, h:h + 1]                              # (tq, 1)
        l_prev = l_sc[:, h:h + 1]
        m_new = jnp.maximum(m_prev, jnp.max(s, axis=-1, keepdims=True))
        alpha = jnp.exp(m_prev - m_new)                        # (tq, 1) f32
        # exp in bf16 on v6e/v7x (bf16 EUP ~2x, drops an (tq,tk) f32 cast);
        # Mosaic upcasts on v5e.  Denominator accumulation stays f32.
        p = jnp.exp((s - m_new).astype(softmax_exp_dtype))     # (tq, tk)
        p_sum = jnp.sum(p.astype(jnp.float32), axis=-1, keepdims=True)

        l_sc[:, h:h + 1] = alpha * l_prev + p_sum
        m_sc[:, h:h + 1] = m_new
        pv = jnp.dot(p.astype(jnp.bfloat16), v_bf[:, sl],
                     preferred_element_type=jnp.float32)       # (tq, dh) f32
        acc_sc[:, sl] = alpha * acc_sc[:, sl] + pv

    # ---- epilogue: normalize, merge heads, output projection, single store. --
    @pl.when(ki == nkv - 1)
    def _finalize():
        outs = []
        for h in range(heads):
            sl = slice(h * dim_head, (h + 1) * dim_head)
            inv = pl.reciprocal(l_sc[:, h:h + 1], approx=True)
            outs.append((acc_sc[:, sl] * inv).astype(jnp.bfloat16))
        hid = jnp.concatenate(outs, axis=-1)                   # (tq, H) bf16, lane-dense
        o_ref[...] = jnp.dot(hid, wo_ref[...],
                             preferred_element_type=jnp.float32)


def attention_forward(x, params, *, heads, dim_head, block_q=None, block_kv=None,
                      softmax_exp_dtype=jnp.bfloat16):
    B, N, D = x.shape
    H = heads * dim_head
    bf = jnp.bfloat16

    block_q = min(block_q or 128, N)
    block_kv = min(block_kv or 128, N)
    assert N % block_q == 0 and N % block_kv == 0, \
        "sequence length must be divisible by block_q / block_kv"

    # Weights as bf16 (halved DMA/VMEM); f32 accumulation in-kernel.
    wqn = jnp.concatenate([params["wq_scaled"], params["w_nullk"]],
                          axis=1).astype(bf)                   # (D, H+heads)
    wkt = params["wk"].T.astype(bf)                            # (H, D) — K weight, pre-transposed
    wv = params["wv"].astype(bf)                               # (D, H)
    wo = params["wo"].astype(bf)                               # (H, D)
    nullv = params["null_v"].reshape(1, H)                     # (1, H) f32
    gamma = params["gamma_scaled"]                             # (1, D) f32

    kern = partial(_flash_attention_kernel, heads=heads, dim_head=dim_head,
                   softmax_exp_dtype=softmax_exp_dtype)
    grid = (B, N // block_q, N // block_kv)

    return pl.pallas_call(
        kern,
        out_shape=jax.ShapeDtypeStruct((B, N, D), jnp.float32),
        grid_spec=pltpu.PrefetchScalarGridSpec(
            num_scalar_prefetch=0,
            grid=grid,
            in_specs=[
                pl.BlockSpec((None, block_q, D), lambda b, qi, ki: (b, qi, 0)),   # x (Q side)
                pl.BlockSpec((None, block_kv, D), lambda b, qi, ki: (b, ki, 0)),  # x (KV side)
                pl.BlockSpec((1, D), lambda b, qi, ki: (0, 0)),                   # gamma*sqrt(D)
                pl.BlockSpec((D, H + heads), lambda b, qi, ki: (0, 0)),           # [Wq*s | Wnullk]
                pl.BlockSpec((H, D), lambda b, qi, ki: (0, 0)),                   # Wk^T
                pl.BlockSpec((D, H), lambda b, qi, ki: (0, 0)),                   # Wv
                pl.BlockSpec((H, D), lambda b, qi, ki: (0, 0)),                   # Wo
                pl.BlockSpec((1, H), lambda b, qi, ki: (0, 0)),                   # null_v (flat)
            ],
            out_specs=pl.BlockSpec((None, block_q, D), lambda b, qi, ki: (b, qi, 0)),
            scratch_shapes=[
                pltpu.VMEM((block_q, H), jnp.bfloat16),        # cached q (per q-tile)
                pltpu.VMEM((block_q, heads), jnp.float32),     # running max m
                pltpu.VMEM((block_q, heads), jnp.float32),     # running denom l
                pltpu.VMEM((block_q, H), jnp.float32),         # running numerator acc
            ],
        ),
        compiler_params=pltpu.CompilerParams(
            dimension_semantics=("parallel", "parallel", "arbitrary"),
            vmem_limit_bytes=48 * 1024 * 1024,
        ),
    )(x, x, gamma, wqn, wkt, wv, wo, nullv)


def make_params(key, dim, heads, dim_head):
    """Deterministic synthetic parameters matching PyTorch module shapes."""
    H = heads * dim_head
    scale = dim_head ** -0.5
    k1, k2, k3, k4 = jax.random.split(key, 4)

    # PyTorch shapes: to_q.weight (H, D), to_kv.weight (2H, D), to_out.weight (D, H)
    wq_pt = jax.random.normal(k1, (H, dim), jnp.float32) / (dim ** 0.5)
    wkv_pt = jax.random.normal(k2, (2 * H, dim), jnp.float32) / (dim ** 0.5)
    wo_pt = jax.random.normal(k3, (dim, H), jnp.float32) / (H ** 0.5)
    null_kv = jax.random.normal(k4, (2, heads, dim_head), jnp.float32)
    gamma = jnp.ones((dim,), jnp.float32)

    # to_kv split exactly as the module: '(r h d) i -> r h d i' with r=1,
    # then chunk(2, dim=-1)  ->  per head, first dim_head rows are K, last are V.
    wkv_r = wkv_pt.reshape(heads, 2 * dim_head, dim)
    wk_pt = wkv_r[:, :dim_head, :].reshape(H, dim)
    wv_pt = wkv_r[:, dim_head:, :].reshape(H, dim)

    wq_scaled = wq_pt.T * scale                                 # (D, H), q scale folded
    # Null-key score projection: for head h, Wq_scaled[:, h*dh:(h+1)*dh] @ null_k[h]
    w_nullk = jnp.einsum('dhe,he->dh',
                         wq_scaled.reshape(dim, heads, dim_head), null_kv[0])  # (D, heads)

    return {
        "gamma_scaled": (gamma * (dim ** 0.5)).reshape(1, dim),  # sqrt(D) folded into gamma
        "wq_scaled": wq_scaled,        # (D, H)
        "wk": wk_pt.T,                 # (D, H)
        "wv": wv_pt.T,                 # (D, H)
        "wo": wo_pt.T,                 # (H, D)
        "w_nullk": w_nullk,            # (D, heads)
        "null_k": null_kv[0],          # (heads, dh)
        "null_v": null_kv[1],          # (heads, dh)
    }


def reference(x, params, *, heads, dim_head):
    """Pure-JAX f32 reference mirroring the PyTorch forward (default args)."""
    B, N, D = x.shape
    nrm = jnp.sqrt(jnp.sum(x * x, axis=-1, keepdims=True))
    xn = x / jnp.maximum(nrm, 1e-12) * params["gamma_scaled"]

    def split_heads(t):
        return t.reshape(B, N, heads, dim_head).transpose(0, 2, 1, 3)

    q = split_heads(xn @ params["wq_scaled"])     # scale already folded into Wq
    k = split_heads(xn @ params["wk"])
    v = split_heads(xn @ params["wv"])
    nk = jnp.broadcast_to(params["null_k"][None, :, None, :], (B, heads, 1, dim_head))
    nv = jnp.broadcast_to(params["null_v"][None, :, None, :], (B, heads, 1, dim_head))
    k = jnp.concatenate([nk, k], axis=2)
    v = jnp.concatenate([nv, v], axis=2)
    sim = jnp.einsum('bhid,bhjd->bhij', q, k)
    attn = jax.nn.softmax(sim, axis=-1)
    out = jnp.einsum('bhij,bhjd->bhid', attn, v)
    out = out.transpose(0, 2, 1, 3).reshape(B, N, heads * dim_head)
    return out @ params["wo"]


if __name__ == "__main__":
    # Small deterministic test; block_q/block_kv < N so the online-softmax
    # flash path (multiple q tiles, multiple kv tiles) is actually exercised.
    # NOTE: this shape is lane-sparse / overhead-bound — benchmark at D,H that
    # are multiples of 128 for meaningful performance numbers.
    B, N, D = 2, 16, 32
    heads, dim_head = 4, 16

    key = jax.random.PRNGKey(0)
    kx, kp = jax.random.split(key)
    x = jax.random.normal(kx, (B, N, D), jnp.float32)
    params = make_params(kp, D, heads, dim_head)

    out = attention_forward(x, params, heads=heads, dim_head=dim_head,
                            block_q=8, block_kv=8)
    out = jax.block_until_ready(out)

    ref = reference(x, params, heads=heads, dim_head=dim_head)
    assert out.shape == (B, N, D)
    # bf16 matmul inputs + bf16 exp + approximate reciprocal -> loosened tolerance.
    assert jnp.allclose(out, ref, atol=5e-2, rtol=5e-2), "mismatch vs reference"

    print("KERNEL_OK")
</pallas_src>

<mosaic_0001>
module attributes {stable_mosaic.version = 11 : i64} {
  func.func @_flash_attention_kernel(%arg0: i32, %arg1: i32, %arg2: i32, %arg3: memref<1x8x32xf32, #tpu.memory_space<vmem>>, %arg4: memref<1x8x32xf32, #tpu.memory_space<vmem>>, %arg5: memref<1x32xf32, #tpu.memory_space<vmem>>, %arg6: memref<32x68xbf16, #tpu.memory_space<vmem>>, %arg7: memref<64x32xbf16, #tpu.memory_space<vmem>>, %arg8: memref<32x64xbf16, #tpu.memory_space<vmem>>, %arg9: memref<64x32xbf16, #tpu.memory_space<vmem>>, %arg10: memref<1x64xf32, #tpu.memory_space<vmem>>, %arg11: memref<1x8x32xf32, #tpu.memory_space<vmem>>, %arg12: memref<8x64xbf16, #tpu.memory_space<vmem>>, %arg13: memref<8x4xf32, #tpu.memory_space<vmem>>, %arg14: memref<8x4xf32, #tpu.memory_space<vmem>>, %arg15: memref<8x64xf32, #tpu.memory_space<vmem>>) attributes {dimension_semantics = [#tpu.dimension_semantics<parallel>, #tpu.dimension_semantics<parallel>, #tpu.dimension_semantics<arbitrary>], iteration_bounds = array<i64: 2, 2, 2>, scalar_prefetch = 0 : i64, scratch_operands = 4 : i64, tpu.core_type = #tpu.core_type<tc>, window_params = [{transform_indices = @transform_0, window_bounds = array<i64: 1, 8, 32>}, {transform_indices = @transform_1, window_bounds = array<i64: 1, 8, 32>}, {pipeline_mode = #tpu.pipeline_mode<synchronous>, transform_indices = @transform_2, window_bounds = array<i64: 1, 32>}, {pipeline_mode = #tpu.pipeline_mode<synchronous>, transform_indices = @transform_3, window_bounds = array<i64: 32, 68>}, {pipeline_mode = #tpu.pipeline_mode<synchronous>, transform_indices = @transform_4, window_bounds = array<i64: 64, 32>}, {pipeline_mode = #tpu.pipeline_mode<synchronous>, transform_indices = @transform_5, window_bounds = array<i64: 32, 64>}, {pipeline_mode = #tpu.pipeline_mode<synchronous>, transform_indices = @transform_6, window_bounds = array<i64: 64, 32>}, {pipeline_mode = #tpu.pipeline_mode<synchronous>, transform_indices = @transform_7, window_bounds = array<i64: 1, 64>}, {transform_indices = @transform_8, window_bounds = array<i64: 1, 8, 32>}]} {
    %c0 = arith.constant 0 : index
    %c0_0 = arith.constant 0 : index
    %0 = vector.load %arg5[%c0, %c0_0] : memref<1x32xf32, #tpu.memory_space<vmem>>, vector<1x32xf32>
    %c0_i32 = arith.constant 0 : i32
    %1 = arith.cmpi eq, %arg2, %c0_i32 : i32
    %2 = arith.extui %1 : i1 to i32
    %c0_i32_1 = arith.constant 0 : i32
    %3 = arith.cmpi ne, %2, %c0_i32_1 : i32
    scf.if %3 {
      %c0_79 = arith.constant 0 : index
      %c0_80 = arith.constant 0 : index
      %c0_81 = arith.constant 0 : index
      %138 = vector.load %arg3[%c0_79, %c0_80, %c0_81] : memref<1x8x32xf32, #tpu.memory_space<vmem>>, vector<1x8x32xf32>
      %139 = vector.shape_cast %138 : vector<1x8x32xf32> to vector<8x32xf32>
      %140 = arith.mulf %139, %139 : vector<8x32xf32>
      %cst_82 = arith.constant dense<0.000000e+00> : vector<8xf32>
      %141 = vector.multi_reduction <add>, %140, %cst_82 [1] : vector<8x32xf32> to vector<8xf32>
      %142 = vector.shape_cast %141 : vector<8xf32> to vector<8x1xf32>
      %cst_83 = arith.constant 1.000000e-24 : f32
      %143 = vector.broadcast %cst_83 : f32 to vector<8x1xf32>
      %144 = arith.maximumf %142, %143 : vector<8x1xf32>
      %145 = math.rsqrt %144 : vector<8x1xf32>
      %146 = vector.broadcast %145 : vector<8x1xf32> to vector<8x32xf32>
      %147 = arith.mulf %139, %146 : vector<8x32xf32>
      %148 = vector.broadcast %0 : vector<1x32xf32> to vector<8x32xf32>
      %149 = arith.mulf %147, %148 : vector<8x32xf32>
      %150 = arith.truncf %149 : vector<8x32xf32> to vector<8x32xbf16>
      %c0_84 = arith.constant 0 : index
      %c0_85 = arith.constant 0 : index
      %151 = vector.load %arg6[%c0_84, %c0_85] : memref<32x68xbf16, #tpu.memory_space<vmem>>, vector<32x68xbf16>
      %cst_86 = arith.constant dense<0.000000e+00> : vector<8x68xf32>
      %152 = tpu.matmul %150, %151, %cst_86 {dimension_numbers = #tpu.dot_dimension_numbers<[1], [0], [0], [1], [0, 0, 1, 1], [], []>} : vector<8x32xbf16>, vector<32x68xbf16>, vector<8x68xf32> -> vector<8x68xf32>
      %153 = vector.extract_strided_slice %152 {offsets = [0, 0], sizes = [8, 64], strides = [1, 1]} : vector<8x68xf32> to vector<8x64xf32>
      %154 = arith.truncf %153 : vector<8x64xf32> to vector<8x64xbf16>
      %c0_87 = arith.constant 0 : index
      %c0_88 = arith.constant 0 : index
      %155 = vector.load %arg12[%c0_87, %c0_88] : memref<8x64xbf16, #tpu.memory_space<vmem>>, vector<8x64xbf16>
      tpu.vector_store %arg12[%c0_87, %c0_88], %154 {strides = array<i32>} : memref<8x64xbf16, #tpu.memory_space<vmem>>, vector<8x64xbf16>,
      %156 = vector.extract_strided_slice %152 {offsets = [0, 64], sizes = [8, 4], strides = [1, 1]} : vector<8x68xf32> to vector<8x4xf32>
      %c0_89 = arith.constant 0 : index
      %c0_90 = arith.constant 0 : index
      %157 = vector.load %arg13[%c0_89, %c0_90] : memref<8x4xf32, #tpu.memory_space<vmem>>, vector<8x4xf32>
      tpu.vector_store %arg13[%c0_89, %c0_90], %156 {strides = array<i32>} : memref<8x4xf32, #tpu.memory_space<vmem>>, vector<8x4xf32>,
      %cst_91 = arith.constant 1.000000e+00 : f32
      %158 = vector.broadcast %cst_91 : f32 to vector<8x4xf32>
      %c0_92 = arith.constant 0 : index
      %c0_93 = arith.constant 0 : index
      %159 = vector.load %arg14[%c0_92, %c0_93] : memref<8x4xf32, #tpu.memory_space<vmem>>, vector<8x4xf32>
      tpu.vector_store %arg14[%c0_92, %c0_93], %158 {strides = array<i32>} : memref<8x4xf32, #tpu.memory_space<vmem>>, vector<8x4xf32>,
      %c0_94 = arith.constant 0 : index
      %c0_95 = arith.constant 0 : index
      %160 = vector.load %arg10[%c0_94, %c0_95] : memref<1x64xf32, #tpu.memory_space<vmem>>, vector<1x64xf32>
      %161 = vector.shape_cast %160 : vector<1x64xf32> to vector<1x64xf32>
      %162 = vector.broadcast %161 : vector<1x64xf32> to vector<8x64xf32>
      %c0_96 = arith.constant 0 : index
      %c0_97 = arith.constant 0 : index
      %163 = vector.load %arg15[%c0_96, %c0_97] : memref<8x64xf32, #tpu.memory_space<vmem>>, vector<8x64xf32>
      tpu.vector_store %arg15[%c0_96, %c0_97], %162 {strides = array<i32>} : memref<8x64xf32, #tpu.memory_space<vmem>>, vector<8x64xf32>,
    } else {
    }
    %c0_2 = arith.constant 0 : index
    %c0_3 = arith.constant 0 : index
    %c0_4 = arith.constant 0 : index
    %4 = vector.load %arg4[%c0_2, %c0_3, %c0_4] : memref<1x8x32xf32, #tpu.memory_space<vmem>>, vector<1x8x32xf32>
    %5 = vector.shape_cast %4 : vector<1x8x32xf32> to vector<8x32xf32>
    %6 = arith.mulf %5, %5 : vector<8x32xf32>
    %cst = arith.constant dense<0.000000e+00> : vector<8xf32>
    %7 = vector.multi_reduction <add>, %6, %cst [1] : vector<8x32xf32> to vector<8xf32>
    %8 = vector.shape_cast %7 : vector<8xf32> to vector<8x1xf32>
    %cst_5 = arith.constant 1.000000e-24 : f32
    %9 = vector.broadcast %cst_5 : f32 to vector<8x1xf32>
    %10 = arith.maximumf %8, %9 : vector<8x1xf32>
    %11 = math.rsqrt %10 : vector<8x1xf32>
    %12 = vector.broadcast %11 : vector<8x1xf32> to vector<8x32xf32>
    %13 = arith.mulf %5, %12 : vector<8x32xf32>
    %14 = vector.broadcast %0 : vector<1x32xf32> to vector<8x32xf32>
    %15 = arith.mulf %13, %14 : vector<8x32xf32>
    %16 = arith.truncf %15 : vector<8x32xf32> to vector<8x32xbf16>
    %c0_6 = arith.constant 0 : index
    %c0_7 = arith.constant 0 : index
    %17 = vector.load %arg8[%c0_6, %c0_7] : memref<32x64xbf16, #tpu.memory_space<vmem>>, vector<32x64xbf16>
    %cst_8 = arith.constant dense<0.000000e+00> : vector<8x64xf32>
    %18 = tpu.matmul %16, %17, %cst_8 {dimension_numbers = #tpu.dot_dimension_numbers<[1], [0], [0], [1], [0, 0, 1, 1], [], []>} : vector<8x32xbf16>, vector<32x64xbf16>, vector<8x64xf32> -> vector<8x64xf32>
    %19 = arith.truncf %18 : vector<8x64xf32> to vector<8x64xbf16>
    %c0_9 = arith.constant 0 : index
    %c0_10 = arith.constant 0 : index
    %20 = vector.load %arg7[%c0_9, %c0_10] : memref<64x32xbf16, #tpu.memory_space<vmem>>, vector<64x32xbf16>
    "tpu.trace_start"() <{level = 10 : i32, message = "hd,nd->hn"}> : () -> ()
    %cst_11 = arith.constant dense<0.000000e+00> : vector<64x8xf32>
    %21 = tpu.matmul %20, %16, %cst_11 {dimension_numbers = #tpu.dot_dimension_numbers<[1], [1], [0], [0], [0, 0, 1, 0], [], []>} : vector<64x32xbf16>, vector<8x32xbf16>, vector<64x8xf32> -> vector<64x8xf32>
    "tpu.trace_stop"() : () -> ()
    %22 = arith.truncf %21 : vector<64x8xf32> to vector<64x8xbf16>
    %c0_12 = arith.constant 0 : index
    %c0_13 = arith.constant 0 : index
    %23 = vector.load %arg12[%c0_12, %c0_13] : memref<8x64xbf16, #tpu.memory_space<vmem>>, vector<8x16xbf16>
    %24 = vector.extract_strided_slice %22 {offsets = [0, 0], sizes = [16, 8], strides = [1, 1]} : vector<64x8xbf16> to vector<16x8xbf16>
    %cst_14 = arith.constant dense<0.000000e+00> : vector<8x8xf32>
    %25 = tpu.matmul %23, %24, %cst_14 {dimension_numbers = #tpu.dot_dimension_numbers<[1], [0], [0], [1], [0, 0, 1, 1], [], []>} : vector<8x16xbf16>, vector<16x8xbf16>, vector<8x8xf32> -> vector<8x8xf32>
    %c0_15 = arith.constant 0 : index
    %c0_16 = arith.constant 0 : index
    %26 = vector.load %arg13[%c0_15, %c0_16] : memref<8x4xf32, #tpu.memory_space<vmem>>, vector<8x1xf32>
    %c0_17 = arith.constant 0 : index
    %c0_18 = arith.constant 0 : index
    %27 = vector.load %arg14[%c0_17, %c0_18] : memref<8x4xf32, #tpu.memory_space<vmem>>, vector<8x1xf32>
    %cst_19 = arith.constant dense<0xFF800000> : vector<8xf32>
    %28 = vector.multi_reduction <maximumf>, %25, %cst_19 [1] : vector<8x8xf32> to vector<8xf32>
    %29 = vector.shape_cast %28 : vector<8xf32> to vector<8x1xf32>
    %30 = arith.maximumf %26, %29 : vector<8x1xf32>
    %31 = arith.subf %26, %30 : vector<8x1xf32>
    %32 = math.exp %31 : vector<8x1xf32>
    %33 = vector.broadcast %30 : vector<8x1xf32> to vector<8x8xf32>
    %34 = arith.subf %25, %33 : vector<8x8xf32>
    %35 = arith.truncf %34 : vector<8x8xf32> to vector<8x8xbf16>
    %36 = math.exp %35 : vector<8x8xbf16>
    %37 = arith.extf %36 : vector<8x8xbf16> to vector<8x8xf32>
    %cst_20 = arith.constant dense<0.000000e+00> : vector<8xf32>
    %38 = vector.multi_reduction <add>, %37, %cst_20 [1] : vector<8x8xf32> to vector<8xf32>
    %39 = vector.shape_cast %38 : vector<8xf32> to vector<8x1xf32>
    %40 = arith.mulf %32, %27 : vector<8x1xf32>
    %41 = arith.addf %40, %39 : vector<8x1xf32>
    %c0_21 = arith.constant 0 : index
    %c0_22 = arith.constant 0 : index
    %42 = vector.load %arg14[%c0_21, %c0_22] : memref<8x4xf32, #tpu.memory_space<vmem>>, vector<8x1xf32>
    tpu.vector_store %arg14[%c0_21, %c0_22], %41 {strides = array<i32>} : memref<8x4xf32, #tpu.memory_space<vmem>>, vector<8x1xf32>,
    %c0_23 = arith.constant 0 : index
    %c0_24 = arith.constant 0 : index
    %43 = vector.load %arg13[%c0_23, %c0_24] : memref<8x4xf32, #tpu.memory_space<vmem>>, vector<8x1xf32>
    tpu.vector_store %arg13[%c0_23, %c0_24], %30 {strides = array<i32>} : memref<8x4xf32, #tpu.memory_space<vmem>>, vector<8x1xf32>,
    %44 = vector.extract_strided_slice %19 {offsets = [0, 0], sizes = [8, 16], strides = [1, 1]} : vector<8x64xbf16> to vector<8x16xbf16>
    %cst_25 = arith.constant dense<0.000000e+00> : vector<8x16xf32>
    %45 = tpu.matmul %36, %44, %cst_25 {dimension_numbers = #tpu.dot_dimension_numbers<[1], [0], [0], [1], [0, 0, 1, 1], [], []>} : vector<8x8xbf16>, vector<8x16xbf16>, vector<8x16xf32> -> vector<8x16xf32>
    %c0_26 = arith.constant 0 : index
    %c0_27 = arith.constant 0 : index
    %46 = vector.load %arg15[%c0_26, %c0_27] : memref<8x64xf32, #tpu.memory_space<vmem>>, vector<8x16xf32>
    %47 = vector.broadcast %32 : vector<8x1xf32> to vector<8x16xf32>
    %48 = arith.mulf %47, %46 : vector<8x16xf32>
    %49 = arith.addf %48, %45 : vector<8x16xf32>
    %c0_28 = arith.constant 0 : index
    %c0_29 = arith.constant 0 : index
    %50 = vector.load %arg15[%c0_28, %c0_29] : memref<8x64xf32, #tpu.memory_space<vmem>>, vector<8x16xf32>
    tpu.vector_store %arg15[%c0_28, %c0_29], %49 {strides = array<i32>} : memref<8x64xf32, #tpu.memory_space<vmem>>, vector<8x16xf32>,
    %c0_30 = arith.constant 0 : index
    %c16 = arith.constant 16 : index
    %51 = vector.load %arg12[%c0_30, %c16] : memref<8x64xbf16, #tpu.memory_space<vmem>>, vector<8x16xbf16>
    %52 = vector.extract_strided_slice %22 {offsets = [16, 0], sizes = [16, 8], strides = [1, 1]} : vector<64x8xbf16> to vector<16x8xbf16>
    %cst_31 = arith.constant dense<0.000000e+00> : vector<8x8xf32>
    %53 = tpu.matmul %51, %52, %cst_31 {dimension_numbers = #tpu.dot_dimension_numbers<[1], [0], [0], [1], [0, 0, 1, 1], [], []>} : vector<8x16xbf16>, vector<16x8xbf16>, vector<8x8xf32> -> vector<8x8xf32>
    %c0_32 = arith.constant 0 : index
    %c1 = arith.constant 1 : index
    %54 = vector.load %arg13[%c0_32, %c1] : memref<8x4xf32, #tpu.memory_space<vmem>>, vector<8x1xf32>
    %c0_33 = arith.constant 0 : index
    %c1_34 = arith.constant 1 : index
    %55 = vector.load %arg14[%c0_33, %c1_34] : memref<8x4xf32, #tpu.memory_space<vmem>>, vector<8x1xf32>
    %cst_35 = arith.constant dense<0xFF800000> : vector<8xf32>
    %56 = vector.multi_reduction <maximumf>, %53, %cst_35 [1] : vector<8x8xf32> to vector<8xf32>
    %57 = vector.shape_cast %56 : vector<8xf32> to vector<8x1xf32>
    %58 = arith.maximumf %54, %57 : vector<8x1xf32>
    %59 = arith.subf %54, %58 : vector<8x1xf32>
    %60 = math.exp %59 : vector<8x1xf32>
    %61 = vector.broadcast %58 : vector<8x1xf32> to vector<8x8xf32>
    %62 = arith.subf %53, %61 : vector<8x8xf32>
    %63 = arith.truncf %62 : vector<8x8xf32> to vector<8x8xbf16>
    %64 = math.exp %63 : vector<8x8xbf16>
    %65 = arith.extf %64 : vector<8x8xbf16> to vector<8x8xf32>
    %cst_36 = arith.constant dense<0.000000e+00> : vector<8xf32>
    %66 = vector.multi_reduction <add>, %65, %cst_36 [1] : vector<8x8xf32> to vector<8xf32>
    %67 = vector.shape_cast %66 : vector<8xf32> to vector<8x1xf32>
    %68 = arith.mulf %60, %55 : vector<8x1xf32>
    %69 = arith.addf %68, %67 : vector<8x1xf32>
    %c0_37 = arith.constant 0 : index
    %c1_38 = arith.constant 1 : index
    %70 = vector.load %arg14[%c0_37, %c1_38] : memref<8x4xf32, #tpu.memory_space<vmem>>, vector<8x1xf32>
    tpu.vector_store %arg14[%c0_37, %c1_38], %69 {strides = array<i32>} : memref<8x4xf32, #tpu.memory_space<vmem>>, vector<8x1xf32>,
    %c0_39 = arith.constant 0 : index
    %c1_40 = arith.constant 1 : index
    %71 = vector.load %arg13[%c0_39, %c1_40] : memref<8x4xf32, #tpu.memory_space<vmem>>, vector<8x1xf32>
    tpu.vector_store %arg13[%c0_39, %c1_40], %58 {strides = array<i32>} : memref<8x4xf32, #tpu.memory_space<vmem>>, vector<8x1xf32>,
    %72 = vector.extract_strided_slice %19 {offsets = [0, 16], sizes = [8, 16], strides = [1, 1]} : vector<8x64xbf16> to vector<8x16xbf16>
    %cst_41 = arith.constant dense<0.000000e+00> : vector<8x16xf32>
    %73 = tpu.matmul %64, %72, %cst_41 {dimension_numbers = #tpu.dot_dimension_numbers<[1], [0], [0], [1], [0, 0, 1, 1], [], []>} : vector<8x8xbf16>, vector<8x16xbf16>, vector<8x16xf32> -> vector<8x16xf32>
    %c0_42 = arith.constant 0 : index
    %c16_43 = arith.constant 16 : index
    %74 = vector.load %arg15[%c0_42, %c16_43] : memref<8x64xf32, #tpu.memory_space<vmem>>, vector<8x16xf32>
    %75 = vector.broadcast %60 : vector<8x1xf32> to vector<8x16xf32>
    %76 = arith.mulf %75, %74 : vector<8x16xf32>
    %77 = arith.addf %76, %73 : vector<8x16xf32>
    %c0_44 = arith.constant 0 : index
    %c16_45 = arith.constant 16 : index
    %78 = vector.load %arg15[%c0_44, %c16_45] : memref<8x64xf32, #tpu.memory_space<vmem>>, vector<8x16xf32>
    tpu.vector_store %arg15[%c0_44, %c16_45], %77 {strides = array<i32>} : memref<8x64xf32, #tpu.memory_space<vmem>>, vector<8x16xf32>,
    %c0_46 = arith.constant 0 : index
    %c32 = arith.constant 32 : index
    %79 = vector.load %arg12[%c0_46, %c32] : memref<8x64xbf16, #tpu.memory_space<vmem>>, vector<8x16xbf16>
    %80 = vector.extract_strided_slice %22 {offsets = [32, 0], sizes = [16, 8], strides = [1, 1]} : vector<64x8xbf16> to vector<16x8xbf16>
    %cst_47 = arith.constant dense<0.000000e+00> : vector<8x8xf32>
    %81 = tpu.matmul %79, %80, %cst_47 {dimension_numbers = #tpu.dot_dimension_numbers<[1], [0], [0], [1], [0, 0, 1, 1], [], []>} : vector<8x16xbf16>, vector<16x8xbf16>, vector<8x8xf32> -> vector<8x8xf32>
    %c0_48 = arith.constant 0 : index
    %c2 = arith.constant 2 : index
    %82 = vector.load %arg13[%c0_48, %c2] : memref<8x4xf32, #tpu.memory_space<vmem>>, vector<8x1xf32>
    %c0_49 = arith.constant 0 : index
    %c2_50 = arith.constant 2 : index
    %83 = vector.load %arg14[%c0_49, %c2_50] : memref<8x4xf32, #tpu.memory_space<vmem>>, vector<8x1xf32>
    %cst_51 = arith.constant dense<0xFF800000> : vector<8xf32>
    %84 = vector.multi_reduction <maximumf>, %81, %cst_51 [1] : vector<8x8xf32> to vector<8xf32>
    %85 = vector.shape_cast %84 : vector<8xf32> to vector<8x1xf32>
    %86 = arith.maximumf %82, %85 : vector<8x1xf32>
    %87 = arith.subf %82, %86 : vector<8x1xf32>
    %88 = math.exp %87 : vector<8x1xf32>
    %89 = vector.broadcast %86 : vector<8x1xf32> to vector<8x8xf32>
    %90 = arith.subf %81, %89 : vector<8x8xf32>
    %91 = arith.truncf %90 : vector<8x8xf32> to vector<8x8xbf16>
    %92 = math.exp %91 : vector<8x8xbf16>
    %93 = arith.extf %92 : vector<8x8xbf16> to vector<8x8xf32>
    %cst_52 = arith.constant dense<0.000000e+00> : vector<8xf32>
    %94 = vector.multi_reduction <add>, %93, %cst_52 [1] : vector<8x8xf32> to vector<8xf32>
    %95 = vector.shape_cast %94 : vector<8xf32> to vector<8x1xf32>
    %96 = arith.mulf %88, %83 : vector<8x1xf32>
    %97 = arith.addf %96, %95 : vector<8x1xf32>
    %c0_53 = arith.constant 0 : index
    %c2_54 = arith.constant 2 : index
    %98 = vector.load %arg14[%c0_53, %c2_54] : memref<8x4xf32, #tpu.memory_space<vmem>>, vector<8x1xf32>
    tpu.vector_store %arg14[%c0_53, %c2_54], %97 {strides = array<i32>} : memref<8x4xf32, #tpu.memory_space<vmem>>, vector<8x1xf32>,
    %c0_55 = arith.constant 0 : index
    %c2_56 = arith.constant 2 : index
    %99 = vector.load %arg13[%c0_55, %c2_56] : memref<8x4xf32, #tpu.memory_space<vmem>>, vector<8x1xf32>
    tpu.vector_store %arg13[%c0_55, %c2_56], %86 {strides = array<i32>} : memref<8x4xf32, #tpu.memory_space<vmem>>, vector<8x1xf32>,
    %100 = vector.extract_strided_slice %19 {offsets = [0, 32], sizes = [8, 16], strides = [1, 1]} : vector<8x64xbf16> to vector<8x16xbf16>
    %cst_57 = arith.constant dense<0.000000e+00> : vector<8x16xf32>
    %101 = tpu.matmul %92, %100, %cst_57 {dimension_numbers = #tpu.dot_dimension_numbers<[1], [0], [0], [1], [0, 0, 1, 1], [], []>} : vector<8x8xbf16>, vector<8x16xbf16>, vector<8x16xf32> -> vector<8x16xf32>
    %c0_58 = arith.constant 0 : index
    %c32_59 = arith.constant 32 : index
    %102 = vector.load %arg15[%c0_58, %c32_59] : memref<8x64xf32, #tpu.memory_space<vmem>>, vector<8x16xf32>
    %103 = vector.broadcast %88 : vector<8x1xf32> to vector<8x16xf32>
    %104 = arith.mulf %103, %102 : vector<8x16xf32>
    %105 = arith.addf %104, %101 : vector<8x16xf32>
    %c0_60 = arith.constant 0 : index
    %c32_61 = arith.constant 32 : index
    %106 = vector.load %arg15[%c0_60, %c32_61] : memref<8x64xf32, #tpu.memory_space<vmem>>, vector<8x16xf32>
    tpu.vector_store %arg15[%c0_60, %c32_61], %105 {strides = array<i32>} : memref<8x64xf32, #tpu.memory_space<vmem>>, vector<8x16xf32>,
    %c0_62 = arith.constant 0 : index
    %c48 = arith.constant 48 : index
    %107 = vector.load %arg12[%c0_62, %c48] : memref<8x64xbf16, #tpu.memory_space<vmem>>, vector<8x16xbf16>
    %108 = vector.extract_strided_slice %22 {offsets = [48, 0], sizes = [16, 8], strides = [1, 1]} : vector<64x8xbf16> to vector<16x8xbf16>
    %cst_63 = arith.constant dense<0.000000e+00> : vector<8x8xf32>
    %109 = tpu.matmul %107, %108, %cst_63 {dimension_numbers = #tpu.dot_dimension_numbers<[1], [0], [0], [1], [0, 0, 1, 1], [], []>} : vector<8x16xbf16>, vector<16x8xbf16>, vector<8x8xf32> -> vector<8x8xf32>
    %c0_64 = arith.constant 0 : index
    %c3 = arith.constant 3 : index
    %110 = vector.load %arg13[%c0_64, %c3] : memref<8x4xf32, #tpu.memory_space<vmem>>, vector<8x1xf32>
    %c0_65 = arith.constant 0 : index
    %c3_66 = arith.constant 3 : index
    %111 = vector.load %arg14[%c0_65, %c3_66] : memref<8x4xf32, #tpu.memory_space<vmem>>, vector<8x1xf32>
    %cst_67 = arith.constant dense<0xFF800000> : vector<8xf32>
    %112 = vector.multi_reduction <maximumf>, %109, %cst_67 [1] : vector<8x8xf32> to vector<8xf32>
    %113 = vector.shape_cast %112 : vector<8xf32> to vector<8x1xf32>
    %114 = arith.maximumf %110, %113 : vector<8x1xf32>
    %115 = arith.subf %110, %114 : vector<8x1xf32>
    %116 = math.exp %115 : vector<8x1xf32>
    %117 = vector.broadcast %114 : vector<8x1xf32> to vector<8x8xf32>
    %118 = arith.subf %109, %117 : vector<8x8xf32>
    %119 = arith.truncf %118 : vector<8x8xf32> to vector<8x8xbf16>
    %120 = math.exp %119 : vector<8x8xbf16>
    %121 = arith.extf %120 : vector<8x8xbf16> to vector<8x8xf32>
    %cst_68 = arith.constant dense<0.000000e+00> : vector<8xf32>
    %122 = vector.multi_reduction <add>, %121, %cst_68 [1] : vector<8x8xf32> to vector<8xf32>
    %123 = vector.shape_cast %122 : vector<8xf32> to vector<8x1xf32>
    %124 = arith.mulf %116, %111 : vector<8x1xf32>
    %125 = arith.addf %124, %123 : vector<8x1xf32>
    %c0_69 = arith.constant 0 : index
    %c3_70 = arith.constant 3 : index
    %126 = vector.load %arg14[%c0_69, %c3_70] : memref<8x4xf32, #tpu.memory_space<vmem>>, vector<8x1xf32>
    tpu.vector_store %arg14[%c0_69, %c3_70], %125 {strides = array<i32>} : memref<8x4xf32, #tpu.memory_space<vmem>>, vector<8x1xf32>,
    %c0_71 = arith.constant 0 : index
    %c3_72 = arith.constant 3 : index
    %127 = vector.load %arg13[%c0_71, %c3_72] : memref<8x4xf32, #tpu.memory_space<vmem>>, vector<8x1xf32>
    tpu.vector_store %arg13[%c0_71, %c3_72], %114 {strides = array<i32>} : memref<8x4xf32, #tpu.memory_space<vmem>>, vector<8x1xf32>,
    %128 = vector.extract_strided_slice %19 {offsets = [0, 48], sizes = [8, 16], strides = [1, 1]} : vector<8x64xbf16> to vector<8x16xbf16>
    %cst_73 = arith.constant dense<0.000000e+00> : vector<8x16xf32>
    %129 = tpu.matmul %120, %128, %cst_73 {dimension_numbers = #tpu.dot_dimension_numbers<[1], [0], [0], [1], [0, 0, 1, 1], [], []>} : vector<8x8xbf16>, vector<8x16xbf16>, vector<8x16xf32> -> vector<8x16xf32>
    %c0_74 = arith.constant 0 : index
    %c48_75 = arith.constant 48 : index
    %130 = vector.load %arg15[%c0_74, %c48_75] : memref<8x64xf32, #tpu.memory_space<vmem>>, vector<8x16xf32>
    %131 = vector.broadcast %116 : vector<8x1xf32> to vector<8x16xf32>
    %132 = arith.mulf %131, %130 : vector<8x16xf32>
    %133 = arith.addf %132, %129 : vector<8x16xf32>
    %c0_76 = arith.constant 0 : index
    %c48_77 = arith.constant 48 : index
    %134 = vector.load %arg15[%c0_76, %c48_77] : memref<8x64xf32, #tpu.memory_space<vmem>>, vector<8x16xf32>
    tpu.vector_store %arg15[%c0_76, %c48_77], %133 {strides = array<i32>} : memref<8x64xf32, #tpu.memory_space<vmem>>, vector<8x16xf32>,
    %c1_i32 = arith.constant 1 : i32
    %135 = arith.cmpi eq, %arg2, %c1_i32 : i32
    %136 = arith.extui %135 : i1 to i32
    %c0_i32_78 = arith.constant 0 : i32
    %137 = arith.cmpi ne, %136, %c0_i32_78 : i32
    scf.if %137 {
      %c0_79 = arith.constant 0 : index
      %c0_80 = arith.constant 0 : index
      %138 = vector.load %arg14[%c0_79, %c0_80] : memref<8x4xf32, #tpu.memory_space<vmem>>, vector<8x1xf32>
      %139 = tpu.reciprocal %138 {approx = true} : vector<8x1xf32> -> vector<8x1xf32>
      %c0_81 = arith.constant 0 : index
      %c0_82 = arith.constant 0 : index
      %140 = vector.load %arg15[%c0_81, %c0_82] : memref<8x64xf32, #tpu.memory_space<vmem>>, vector<8x16xf32>
      %141 = vector.broadcast %139 : vector<8x1xf32> to vector<8x16xf32>
      %142 = arith.mulf %140, %141 : vector<8x16xf32>
      %143 = arith.truncf %142 : vector<8x16xf32> to vector<8x16xbf16>
      %c0_83 = arith.constant 0 : index
      %c1_84 = arith.constant 1 : index
      %144 = vector.load %arg14[%c0_83, %c1_84] : memref<8x4xf32, #tpu.memory_space<vmem>>, vector<8x1xf32>
      %145 = tpu.reciprocal %144 {approx = true} : vector<8x1xf32> -> vector<8x1xf32>
      %c0_85 = arith.constant 0 : index
      %c16_86 = arith.constant 16 : index
      %146 = vector.load %arg15[%c0_85, %c16_86] : memref<8x64xf32, #tpu.memory_space<vmem>>, vector<8x16xf32>
      %147 = vector.broadcast %145 : vector<8x1xf32> to vector<8x16xf32>
      %148 = arith.mulf %146, %147 : vector<8x16xf32>
      %149 = arith.truncf %148 : vector<8x16xf32> to vector<8x16xbf16>
      %c0_87 = arith.constant 0 : index
      %c2_88 = arith.constant 2 : index
      %150 = vector.load %arg14[%c0_87, %c2_88] : memref<8x4xf32, #tpu.memory_space<vmem>>, vector<8x1xf32>
      %151 = tpu.reciprocal %150 {approx = true} : vector<8x1xf32> -> vector<8x1xf32>
      %c0_89 = arith.constant 0 : index
      %c32_90 = arith.constant 32 : index
      %152 = vector.load %arg15[%c0_89, %c32_90] : memref<8x64xf32, #tpu.memory_space<vmem>>, vector<8x16xf32>
      %153 = vector.broadcast %151 : vector<8x1xf32> to vector<8x16xf32>
      %154 = arith.mulf %152, %153 : vector<8x16xf32>
      %155 = arith.truncf %154 : vector<8x16xf32> to vector<8x16xbf16>
      %c0_91 = arith.constant 0 : index
      %c3_92 = arith.constant 3 : index
      %156 = vector.load %arg14[%c0_91, %c3_92] : memref<8x4xf32, #tpu.memory_space<vmem>>, vector<8x1xf32>
      %157 = tpu.reciprocal %156 {approx = true} : vector<8x1xf32> -> vector<8x1xf32>
      %c0_93 = arith.constant 0 : index
      %c48_94 = arith.constant 48 : index
      %158 = vector.load %arg15[%c0_93, %c48_94] : memref<8x64xf32, #tpu.memory_space<vmem>>, vector<8x16xf32>
      %159 = vector.broadcast %157 : vector<8x1xf32> to vector<8x16xf32>
      %160 = arith.mulf %158, %159 : vector<8x16xf32>
      %161 = arith.truncf %160 : vector<8x16xf32> to vector<8x16xbf16>
      %162 = tpu.concatenate %143, %149, %155, %161 in 1 : vector<8x16xbf16>, vector<8x16xbf16>, vector<8x16xbf16>, vector<8x16xbf16> -> vector<8x64xbf16>
      %c0_95 = arith.constant 0 : index
      %c0_96 = arith.constant 0 : index
      %163 = vector.load %arg9[%c0_95, %c0_96] : memref<64x32xbf16, #tpu.memory_space<vmem>>, vector<64x32xbf16>
      %cst_97 = arith.constant dense<0.000000e+00> : vector<8x32xf32>
      %164 = tpu.matmul %162, %163, %cst_97 {dimension_numbers = #tpu.dot_dimension_numbers<[1], [0], [0], [1], [0, 0, 1, 1], [], []>} : vector<8x64xbf16>, vector<64x32xbf16>, vector<8x32xf32> -> vector<8x32xf32>
      %c0_98 = arith.constant 0 : index
      %c0_99 = arith.constant 0 : index
      %c0_100 = arith.constant 0 : index
      %165 = vector.load %arg11[%c0_98, %c0_99, %c0_100] : memref<1x8x32xf32, #tpu.memory_space<vmem>>, vector<1x8x32xf32>
      %166 = vector.shape_cast %165 : vector<1x8x32xf32> to vector<8x32xf32>
      %167 = vector.shape_cast %164 : vector<8x32xf32> to vector<1x8x32xf32>
      tpu.vector_store %arg11[%c0_98, %c0_99, %c0_100], %167 {strides = array<i32>} : memref<1x8x32xf32, #tpu.memory_space<vmem>>, vector<1x8x32xf32>,
    } else {
    }
    return
  }
  func.func @transform_0(%arg0: i32, %arg1: i32, %arg2: i32) -> (i32, i32, i32) {
    %c0_i32 = arith.constant 0 : i32
    %c0_i32_0 = arith.constant 0 : i32
    return %arg0, %arg1, %c0_i32 : i32, i32, i32
  }
  func.func @transform_1(%arg0: i32, %arg1: i32, %arg2: i32) -> (i32, i32, i32) {
    %c0_i32 = arith.constant 0 : i32
    %c0_i32_0 = arith.constant 0 : i32
    return %arg0, %arg2, %c0_i32 : i32, i32, i32
  }
  func.func @transform_2(%arg0: i32, %arg1: i32, %arg2: i32) -> (i32, i32) {
    %c0_i32 = arith.constant 0 : i32
    %c0_i32_0 = arith.constant 0 : i32
    %c0_i32_1 = arith.constant 0 : i32
    return %c0_i32, %c0_i32_0 : i32, i32
  }
  func.func @transform_3(%arg0: i32, %arg1: i32, %arg2: i32) -> (i32, i32) {
    %c0_i32 = arith.constant 0 : i32
    %c0_i32_0 = arith.constant 0 : i32
    %c0_i32_1 = arith.constant 0 : i32
    return %c0_i32, %c0_i32_0 : i32, i32
  }
  func.func @transform_4(%arg0: i32, %arg1: i32, %arg2: i32) -> (i32, i32) {
    %c0_i32 = arith.constant 0 : i32
    %c0_i32_0 = arith.constant 0 : i32
    %c0_i32_1 = arith.constant 0 : i32
    return %c0_i32, %c0_i32_0 : i32, i32
  }
  func.func @transform_5(%arg0: i32, %arg1: i32, %arg2: i32) -> (i32, i32) {
    %c0_i32 = arith.constant 0 : i32
    %c0_i32_0 = arith.constant 0 : i32
    %c0_i32_1 = arith.constant 0 : i32
    return %c0_i32, %c0_i32_0 : i32, i32
  }
  func.func @transform_6(%arg0: i32, %arg1: i32, %arg2: i32) -> (i32, i32) {
    %c0_i32 = arith.constant 0 : i32
    %c0_i32_0 = arith.constant 0 : i32
    %c0_i32_1 = arith.constant 0 : i32
    return %c0_i32, %c0_i32_0 : i32, i32
  }
  func.func @transform_7(%arg0: i32, %arg1: i32, %arg2: i32) -> (i32, i32) {
    %c0_i32 = arith.constant 0 : i32
    %c0_i32_0 = arith.constant 0 : i32
    %c0_i32_1 = arith.constant 0 : i32
    return %c0_i32, %c0_i32_0 : i32, i32
  }
  func.func @transform_8(%arg0: i32, %arg1: i32, %arg2: i32) -> (i32, i32, i32) {
    %c0_i32 = arith.constant 0 : i32
    %c0_i32_0 = arith.constant 0 : i32
    return %arg0, %arg1, %c0_i32 : i32, i32, i32
  }
}

</mosaic_0001>

<llo_original>
// kernel: tpu_custom_call.1
$region0: #{tpu_custom_call.1}
  #allocation0 [shape = 'u32[]', space=smem, size = 0x4, offset = 0x4, fixed_abs, tag = 'smem constant byte address 0x4 - core index']
  #allocation1 [shape = 'u32[144,128]{1,0:T(1,128)}', space=vmem, size = 0x12000, scoped, tag = 'internal scratch']
  #allocation2 [shape = 'bf16[8,64]{1,0:T(8,128)(2,1)}', space=vmem, size = 0x800, scoped, tag = 'scratch operand']
  #allocation3 [shape = 'f32[8,4]{1,0:T(8,128)}', space=vmem, size = 0x1000, scoped, tag = 'scratch operand']
  #allocation4 [shape = 'f32[8,4]{1,0:T(8,128)}', space=vmem, size = 0x1000, scoped, tag = 'scratch operand']
  #allocation5 [shape = 'f32[8,64]{1,0:T(8,128)}', space=vmem, size = 0x1000, scoped, tag = 'scratch operand']
  %s0 = inlined_call_operand.vmem [shape: f32[2,16,32], index: 0, kind: input, shape index: {}]
  %s1 = inlined_call_operand.vmem [shape: f32[2,16,32], index: 1, kind: input, shape index: {}]
  %s2 = inlined_call_operand.vmem [shape: f32[1,32], index: 2, kind: input, shape index: {}]
  %s3 = inlined_call_operand.vmem [shape: bf16[32,68], index: 3, kind: input, shape index: {}]
  %s4 = inlined_call_operand.vmem [shape: bf16[64,32], index: 4, kind: input, shape index: {}]
  %s5 = inlined_call_operand.vmem [shape: bf16[32,64], index: 5, kind: input, shape index: {}]
  %s6 = inlined_call_operand.vmem [shape: bf16[64,32], index: 6, kind: input, shape index: {}]
  %s7 = inlined_call_operand.vmem [shape: f32[1,64], index: 7, kind: input, shape index: {}]
  %s8 = inlined_call_operand.hbm [shape: f32[2,16,32], index: 8, kind: output, shape index: {}]
  %s9 = sld [smem:[#allocation0]]
  $region73: #{tpu_custom_call.1} parent=0
    _
  %s11 = ssub.s32 1, %s9
  %s12 = scalar_select 0, %s11, %s9
  $region1: #{tpu_custom_call.1} parent=0
    #allocation6 [shape = 'u8[8192]{0}', space=vmem, size = 0x2000, scoped, tag = 'output window, operand 0']
    #allocation7 [shape = 's32[2]{0}', space=sflag, size = 0x8, scoped, tag = 'scoped memory for tpu_custom_call.1']
    %13 = vsyncpa [#allocation7], 0
    %s14 = scalar_lea.sflag [#allocation7], 1
    %15 = vsyncpa %s14, 0
    loop: start=0, step=1, limit=10
    $region2: #{tpu_custom_call.1} parent=1 // loop_pre_header
      _
    $region3: #{tpu_custom_call.1} parent=1 // loop_header
      %s17 = sphi 0, %s21
      %p18 = scmp.ge.s32.totalorder %s17, 10
      %s24 = sphi 0, %s43
      %s25 = sphi 0, %s39
      %s26 = sphi 0, %s35
      %s27 = sphi 0, %s24
      %s28 = sphi 0, %s25
      %s29 = sphi 0, %s26
      %s30 = sphi 0, %s27
      %s31 = sphi 0, %s28
      %s32 = sphi 0, %s29
      %s48 = sphi 0, %s50
      %s51 = sphi 0, %s48
      %s52 = sphi 0, %s51
      %s68 = sphi 0, %s52
      %s76 = sphi 0, %s78
      %s79 = sphi 0, %s76
      %s80 = sphi 0, %s79
      %s96 = sphi 0, %s80
      %s100 = sphi 0, %s100
      %s102 = sphi 0, %s100
      %s103 = sphi 0, %s102
      %s117 = sphi 0, %s103
      %s121 = sphi 0, %s121
      %s123 = sphi 0, %s121
      %s124 = sphi 0, %s123
      %s138 = sphi 0, %s124
      %s142 = sphi 0, %s142
      %s144 = sphi 0, %s142
      %s145 = sphi 0, %s144
      %s159 = sphi 0, %s145
      %s163 = sphi 0, %s163
      %s165 = sphi 0, %s163
      %s166 = sphi 0, %s165
      %s180 = sphi 0, %s166
      %s184 = sphi 0, %s184
      %s186 = sphi 0, %s184
      %s187 = sphi 0, %s186
      %s201 = sphi 0, %s187
      %s205 = sphi 0, %s205
      %s207 = sphi 0, %s205
      %s208 = sphi 0, %s207
      %s222 = sphi 0, %s208
      %s230 = sphi 0, %s232
      %s233 = sphi 0, %s230
      %s234 = sphi 0, %s233
      %s250 = sphi 0, %s234
    $region4: #{tpu_custom_call.1} parent=1 // loop_header_branch
      %20 = sbr.rel (%p18) target = $region8
    $region5: #{tpu_custom_call.1} parent=1 // loop_body
      %s22 = ssub.s32 %s17, 1
      %s23 = ssub.s32 %s17, 2
      %s33 = sadd.s32 1, %s26
      %p34 = scmp.ge.s32.totalorder %s33, 2
      %s35 = scalar_select %p34, 0, %s33
      %s36 = sadd.s32 1, %s25
      %s37 = scalar_select %p34, %s36, %s25
      %p38 = scmp.ge.s32.totalorder %s37, 2
      %s39 = scalar_select %p38, 0, %s37
      %s40 = sadd.s32 1, %s24
      %s41 = scalar_select %p38, %s40, %s24
      %p42 = scmp.ge.s32.totalorder %s41, 2
      %s43 = scalar_select %p42, 0, %s41
      %s44 = ssub.s32 %s24, %s43
      %s45 = ssub.s32 %s25, %s39
      %s46 = sor.u32 %s44, %s45
      %p47 = scmp.eq.s32.totalorder %s46, 0
      %s49 = sadd.s32 %s48, 1
      %s50 = scalar_select %p47, %s48, %s49
      %p53 = pneg %p47
      %p54 = scmp.eq.s32.totalorder %s17, 7
      %p55 = por %p53, %p54
      %p56 = scmp.ne.s32.totalorder %s48, %s51
      %p57 = scmp.eq.s32.totalorder %s17, 0
      %p58 = por %p56, %p57
      %p59 = scmp.ne.s32.totalorder %s48, %s51
      %p60 = scmp.eq.s32.totalorder %s22, 7
      %p61 = por %p59, %p60
      %p62 = scmp.ne.s32.totalorder %s51, %s52
      %p63 = scmp.eq.s32.totalorder %s22, 0
      %p64 = por %p62, %p63
      %p65 = scmp.ne.s32.totalorder %s51, %s52
      %p66 = scmp.eq.s32.totalorder %s23, 7
      %p67 = por %p65, %p66
      %p69 = scmp.ne.s32.totalorder %s52, %s68
      %p70 = scmp.eq.s32.totalorder %s23, 0
      %p71 = por %p69, %p70
      %s72 = ssub.s32 %s24, %s43
      %s73 = ssub.s32 %s26, %s35
      %s74 = sor.u32 %s72, %s73
      %p75 = scmp.eq.s32.totalorder %s74, 0
      %s77 = sadd.s32 %s76, 1
      %s78 = scalar_select %p75, %s76, %s77
      %p81 = pneg %p75
      %p82 = scmp.eq.s32.totalorder %s17, 7
      %p83 = por %p81, %p82
      %p84 = scmp.ne.s32.totalorder %s76, %s79
      %p85 = scmp.eq.s32.totalorder %s17, 0
      %p86 = por %p84, %p85
      %p87 = scmp.ne.s32.totalorder %s76, %s79
      %p88 = scmp.eq.s32.totalorder %s22, 7
      %p89 = por %p87, %p88
      %p90 = scmp.ne.s32.totalorder %s79, %s80
      %p91 = scmp.eq.s32.totalorder %s22, 0
      %p92 = por %p90, %p91
      %p93 = scmp.ne.s32.totalorder %s79, %s80
      %p94 = scmp.eq.s32.totalorder %s23, 7
      %p95 = por %p93, %p94
      %p97 = scmp.ne.s32.totalorder %s80, %s96
      %p98 = scmp.eq.s32.totalorder %s23, 0
      %p99 = por %p97, %p98
      %s101 = sadd.s32 %s100, 1
      %p104 = scmp.eq.s32.totalorder %s17, 7
      %p105 = scmp.ne.s32.totalorder %s100, %s102
      %p106 = scmp.eq.s32.totalorder %s17, 0
      %p107 = por %p105, %p106
      %p108 = scmp.ne.s32.totalorder %s100, %s102
      %p109 = scmp.eq.s32.totalorder %s22, 7
      %p110 = por %p108, %p109
      %p111 = scmp.ne.s32.totalorder %s102, %s103
      %p112 = scmp.eq.s32.totalorder %s22, 0
      %p113 = por %p111, %p112
      %p114 = scmp.ne.s32.totalorder %s102, %s103
      %p115 = scmp.eq.s32.totalorder %s23, 7
      %p116 = por %p114, %p115
      %p118 = scmp.ne.s32.totalorder %s103, %s117
      %p119 = scmp.eq.s32.totalorder %s23, 0
      %p120 = por %p118, %p119
      %s122 = sadd.s32 %s121, 1
      %p125 = scmp.eq.s32.totalorder %s17, 7
      %p126 = scmp.ne.s32.totalorder %s121, %s123
      %p127 = scmp.eq.s32.totalorder %s17, 0
      %p128 = por %p126, %p127
      %p129 = scmp.ne.s32.totalorder %s121, %s123
      %p130 = scmp.eq.s32.totalorder %s22, 7
      %p131 = por %p129, %p130
      %p132 = scmp.ne.s32.totalorder %s123, %s124
      %p133 = scmp.eq.s32.totalorder %s22, 0
      %p134 = por %p132, %p133
      %p135 = scmp.ne.s32.totalorder %s123, %s124
      %p136 = scmp.eq.s32.totalorder %s23, 7
      %p137 = por %p135, %p136
      %p139 = scmp.ne.s32.totalorder %s124, %s138
      %p140 = scmp.eq.s32.totalorder %s23, 0
      %p141 = por %p139, %p140
      %s143 = sadd.s32 %s142, 1
      %p146 = scmp.eq.s32.totalorder %s17, 7
      %p147 = scmp.ne.s32.totalorder %s142, %s144
      %p148 = scmp.eq.s32.totalorder %s17, 0
      %p149 = por %p147, %p148
      %p150 = scmp.ne.s32.totalorder %s142, %s144
      %p151 = scmp.eq.s32.totalorder %s22, 7
      %p152 = por %p150, %p151
      %p153 = scmp.ne.s32.totalorder %s144, %s145
      %p154 = scmp.eq.s32.totalorder %s22, 0
      %p155 = por %p153, %p154
      %p156 = scmp.ne.s32.totalorder %s144, %s145
      %p157 = scmp.eq.s32.totalorder %s23, 7
      %p158 = por %p156, %p157
      %p160 = scmp.ne.s32.totalorder %s145, %s159
      %p161 = scmp.eq.s32.totalorder %s23, 0
      %p162 = por %p160, %p161
      %s164 = sadd.s32 %s163, 1
      %p167 = scmp.eq.s32.totalorder %s17, 7
      %p168 = scmp.ne.s32.totalorder %s163, %s165
      %p169 = scmp.eq.s32.totalorder %s17, 0
      %p170 = por %p168, %p169
      %p171 = scmp.ne.s32.totalorder %s163, %s165
      %p172 = scmp.eq.s32.totalorder %s22, 7
      %p173 = por %p171, %p172
      %p174 = scmp.ne.s32.totalorder %s165, %s166
      %p175 = scmp.eq.s32.totalorder %s22, 0
      %p176 = por %p174, %p175
      %p177 = scmp.ne.s32.totalorder %s165, %s166
      %p178 = scmp.eq.s32.totalorder %s23, 7
      %p179 = por %p177, %p178
      %p181 = scmp.ne.s32.totalorder %s166, %s180
      %p182 = scmp.eq.s32.totalorder %s23, 0
      %p183 = por %p181, %p182
      %s185 = sadd.s32 %s184, 1
      %p188 = scmp.eq.s32.totalorder %s17, 7
      %p189 = scmp.ne.s32.totalorder %s184, %s186
      %p190 = scmp.eq.s32.totalorder %s17, 0
      %p191 = por %p189, %p190
      %p192 = scmp.ne.s32.totalorder %s184, %s186
      %p193 = scmp.eq.s32.totalorder %s22, 7
      %p194 = por %p192, %p193
      %p195 = scmp.ne.s32.totalorder %s186, %s187
      %p196 = scmp.eq.s32.totalorder %s22, 0
      %p197 = por %p195, %p196
      %p198 = scmp.ne.s32.totalorder %s186, %s187
      %p199 = scmp.eq.s32.totalorder %s23, 7
      %p200 = por %p198, %p199
      %p202 = scmp.ne.s32.totalorder %s187, %s201
      %p203 = scmp.eq.s32.totalorder %s23, 0
      %p204 = por %p202, %p203
      %s206 = sadd.s32 %s205, 1
      %p209 = scmp.eq.s32.totalorder %s17, 7
      %p210 = scmp.ne.s32.totalorder %s205, %s207
      %p211 = scmp.eq.s32.totalorder %s17, 0
      %p212 = por %p210, %p211
      %p213 = scmp.ne.s32.totalorder %s205, %s207
      %p214 = scmp.eq.s32.totalorder %s22, 7
      %p215 = por %p213, %p214
      %p216 = scmp.ne.s32.totalorder %s207, %s208
      %p217 = scmp.eq.s32.totalorder %s22, 0
      %p218 = por %p216, %p217
      %p219 = scmp.ne.s32.totalorder %s207, %s208
      %p220 = scmp.eq.s32.totalorder %s23, 7
      %p221 = por %p219, %p220
      %p223 = scmp.ne.s32.totalorder %s208, %s222
      %p224 = scmp.eq.s32.totalorder %s23, 0
      %p225 = por %p223, %p224
      %s226 = ssub.s32 %s24, %s43
      %s227 = ssub.s32 %s25, %s39
      %s228 = sor.u32 %s226, %s227
      %p229 = scmp.eq.s32.totalorder %s228, 0
      %s231 = sadd.s32 %s230, 1
      %s232 = scalar_select %p229, %s230, %s231
      %p235 = pneg %p229
      %p236 = scmp.eq.s32.totalorder %s17, 7
      %p237 = por %p235, %p236
      %p238 = scmp.ne.s32.totalorder %s230, %s233
      %p239 = scmp.eq.s32.totalorder %s17, 0
      %p240 = por %p238, %p239
      %p241 = scmp.ne.s32.totalorder %s230, %s233
      %p242 = scmp.eq.s32.totalorder %s22, 7
      %p243 = por %p241, %p242
      %p244 = scmp.ne.s32.totalorder %s233, %s234
      %p245 = scmp.eq.s32.totalorder %s22, 0
      %p246 = por %p244, %p245
      %p247 = scmp.ne.s32.totalorder %s233, %s234
      %p248 = scmp.eq.s32.totalorder %s23, 7
      %p249 = por %p247, %p248
      %p251 = scmp.ne.s32.totalorder %s234, %s250
      %p252 = scmp.eq.s32.totalorder %s23, 0
      %p253 = por %p251, %p252
      %p254 = scmp.le.s32.totalorder 1, %s17
      %p255 = scmp.lt.s32.totalorder %s17, 9
      %p256 = pnand %p254, %p255
      %p257 = pneg %p256
      // Predicated region
      $region9: #{tpu_custom_call.1} parent=5 // pred_check
        _
      $region10: #{tpu_custom_call.1} parent=5 // pred_check_branch
        %259 = sbr.rel (%p256) target = $region12
      $region11: #{tpu_custom_call.1} parent=5 // pred_region
        %s260 = ssub.s32 %s17, 1
        // Predicated region
        $region13: #{tpu_custom_call.1} parent=11 // pred_check
          %p261 = pneg %p113
        $region14: #{tpu_custom_call.1} parent=11 // pred_check_branch
          %263 = sbr.rel (%p261) target = $region16
        $region15: #{tpu_custom_call.1} parent=11 // pred_region
          _
        $region16: #{tpu_custom_call.1} parent=11 // pred_fallthru
          _
        // Predicated region
        $region17: #{tpu_custom_call.1} parent=11 // pred_check
          %p264 = pneg %p134
        $region18: #{tpu_custom_call.1} parent=11 // pred_check_branch
          %266 = sbr.rel (%p264) target = $region20
        $region19: #{tpu_custom_call.1} parent=11 // pred_region
          _
        $region20: #{tpu_custom_call.1} parent=11 // pred_fallthru
          _
        // Predicated region
        $region21: #{tpu_custom_call.1} parent=11 // pred_check
          %p267 = pneg %p155
        $region22: #{tpu_custom_call.1} parent=11 // pred_check_branch
          %269 = sbr.rel (%p267) target = $region24
        $region23: #{tpu_custom_call.1} parent=11 // pred_region
          _
        $region24: #{tpu_custom_call.1} parent=11 // pred_fallthru
          _
        // Predicated region
        $region25: #{tpu_custom_call.1} parent=11 // pred_check
          %p270 = pneg %p176
        $region26: #{tpu_custom_call.1} parent=11 // pred_check_branch
          %272 = sbr.rel (%p270) target = $region28
        $region27: #{tpu_custom_call.1} parent=11 // pred_region
          _
        $region28: #{tpu_custom_call.1} parent=11 // pred_fallthru
          _
        // Predicated region
        $region29: #{tpu_custom_call.1} parent=11 // pred_check
          %p273 = pneg %p197
        $region30: #{tpu_custom_call.1} parent=11 // pred_check_branch
          %275 = sbr.rel (%p273) target = $region32
        $region31: #{tpu_custom_call.1} parent=11 // pred_region
          _
        $region32: #{tpu_custom_call.1} parent=11 // pred_fallthru
          _
        // Predicated region
        $region33: #{tpu_custom_call.1} parent=11 // pred_check
          %p276 = pneg %p218
        $region34: #{tpu_custom_call.1} parent=11 // pred_check_branch
          %278 = sbr.rel (%p276) target = $region36
        $region35: #{tpu_custom_call.1} parent=11 // pred_region
          _
        $region36: #{tpu_custom_call.1} parent=11 // pred_fallthru
          _
      $region12: #{tpu_custom_call.1} parent=5 // pred_fallthru
        _
      %p279 = scmp.lt.s32.totalorder %s17, 8
      // Predicated region
      $region37: #{tpu_custom_call.1} parent=5 // pred_check
        %p280 = pneg %p279
      $region38: #{tpu_custom_call.1} parent=5 // pred_check_branch
        %282 = sbr.rel (%p280) target = $region40
      $region39: #{tpu_custom_call.1} parent=5 // pred_region
        // Predicated region
        $region41: #{tpu_custom_call.1} parent=39 // pred_check
          %p283 = pneg %p58
        $region42: #{tpu_custom_call.1} parent=39 // pred_check_branch
          %285 = sbr.rel (%p283) target = $region44
        $region43: #{tpu_custom_call.1} parent=39 // pred_region
          %p286 = scmp.lt.s32.totalorder %s24, 1
          %s287 = scalar_select %p286, %s24, 1
          %p288 = scmp.lt.s32.totalorder %s25, 1
          %s289 = scalar_select %p288, %s25, 1
          %s290 = smul.addr %s287, 2
          %s291 = sadd.s32 %s289, %s290
          %s292 = smul.addr %s291, 8
          %s293 = scalar_lea.vmem %s0, %s292
        $region44: #{tpu_custom_call.1} parent=39 // pred_fallthru
          _
        // Predicated region
        $region45: #{tpu_custom_call.1} parent=39 // pred_check
          %p294 = pneg %p86
        $region46: #{tpu_custom_call.1} parent=39 // pred_check_branch
          %296 = sbr.rel (%p294) target = $region48
        $region47: #{tpu_custom_call.1} parent=39 // pred_region
          %p297 = scmp.lt.s32.totalorder %s24, 1
          %s298 = scalar_select %p297, %s24, 1
          %p299 = scmp.lt.s32.totalorder %s26, 1
          %s300 = scalar_select %p299, %s26, 1
          %s301 = smul.addr %s298, 2
          %s302 = sadd.s32 %s300, %s301
          %s303 = smul.addr %s302, 8
          %s304 = scalar_lea.vmem %s1, %s303
        $region48: #{tpu_custom_call.1} parent=39 // pred_fallthru
          _
      $region40: #{tpu_custom_call.1} parent=5 // pred_fallthru
        _
      %p305 = scmp.le.s32.totalorder 1, %s17
      %p306 = scmp.lt.s32.totalorder %s17, 9
      %p307 = pnand %p305, %p306
      %p308 = pneg %p307
      // Predicated region
      $region49: #{tpu_custom_call.1} parent=5 // pred_check
        _
      $region50: #{tpu_custom_call.1} parent=5 // pred_check_branch
        %310 = sbr.rel (%p307) target = $region52
      $region51: #{tpu_custom_call.1} parent=5 // pred_region
        %s311 = ssub.s32 %s17, 1
        %p312 = scmp.lt.s32.totalorder %s27, 1
        %s313 = scalar_select %p312, %s27, 1
        %p314 = scmp.lt.s32.totalorder %s28, 1
        %s315 = scalar_select %p314, %s28, 1
        %s316 = smul.addr %s313, 2
        %s317 = sadd.s32 %s315, %s316
        %s318 = smul.addr %s317, 8
        %s319 = scalar_lea.vmem %s0, %s318
        %p320 = pneg %p64
        %p321 = pneg %p61
        %p322 = scmp.lt.s32.totalorder %s27, 1
        %s323 = scalar_select %p322, %s27, 1
        %p324 = scmp.lt.s32.totalorder %s29, 1
        %s325 = scalar_select %p324, %s29, 1
        %s326 = smul.addr %s323, 2
        %s327 = sadd.s32 %s325, %s326
        %s328 = smul.addr %s327, 8
        %s329 = scalar_lea.vmem %s1, %s328
        %p330 = pneg %p92
        %p331 = pneg %p89
        %p332 = pneg %p113
        %p333 = pneg %p110
        %p334 = pneg %p134
        %p335 = pneg %p131
        %p336 = pneg %p155
        %p337 = pneg %p152
        %p338 = pneg %p176
        %p339 = pneg %p173
        %p340 = pneg %p197
        %p341 = pneg %p194
        %p342 = pneg %p218
        %p343 = pneg %p215
        %p344 = pneg %p246
        %p345 = pneg %p243
        %s346 = sand.u32 %s233, 1
        %s347 = scalar_lea.sflag [#allocation7], %s346
        %s348 = sand.u32 %s233, 1
        %s349 = smul.addr %s348, 8
        %s350 = scalar_lea.vmem [#allocation6], %s349
        %p351 = scmp.lt.s32.totalorder %s27, 1
        %s352 = scalar_select %p351, %s27, 1
        %p353 = scmp.lt.s32.totalorder %s28, 1
        %s354 = scalar_select %p353, %s28, 1
        %s355 = smul.addr %s352, 2
        %s356 = sadd.s32 %s354, %s355
        %s357 = smul.addr %s356, 8
        %s358 = scalar_lea.vmem %s0, %s357
        %p359 = scmp.lt.s32.totalorder %s27, 1
        %s360 = scalar_select %p359, %s27, 1
        %p361 = scmp.lt.s32.totalorder %s29, 1
        %s362 = scalar_select %p361, %s29, 1
        %s363 = smul.addr %s360, 2
        %s364 = sadd.s32 %s362, %s363
        %s365 = smul.addr %s364, 8
        %s366 = scalar_lea.vmem %s1, %s365
        %v368 = vld [vmem:[%s2] sm:$0x1]
        %p369 = scmp.eq.s32.totalorder %s29, 0
        // Predicated region
        $region53: #{tpu_custom_call.1} parent=51 // pred_check
          %p370 = pneg %p369
        $region54: #{tpu_custom_call.1} parent=51 // pred_check_branch
          %372 = sbr.rel (%p370) target = $region56
        $region55: #{tpu_custom_call.1} parent=51 // pred_region
          %v373 = vld [vmem:[%s358] sm:$0xff]
          %v374 = vmul.f32 %v373, %v373
          %vm375 = vcmask 261120
          %v376 = vsel %vm375, %v374, 0.0
          %377 = vadd.xlane.f32.xlu0 %v376
          %v378 = vpop.xlane.xlu0 %377
          %v379 = vmax.f32 %v378, 1e-24
          %v380 = vrsqrt.pop %v379
          %v381 = vmul.f32 %v373, %v380
          %v383 = vlaneseq
          %v384 = vshrl.u32 %v383, 7
          %v385 = vsub.s32 0, %v384
          %v386 = vrot.slane %v368, %v385
          %v388 = vmul.f32 %v381, %v386
          %v389 = vpack.c.bf16 %v388, %v388
          %v390 = vld [vmem:[%s3] sm:$0xf]
          %v391 = vld [vmem:[%s3 + $0x4] sm:$0xf]
          %v392 = vld [vmem:[%s3 + $0x8] sm:$0xf]
          %v393 = vld [vmem:[%s3 + $0xc] sm:$0xf]
          %v398 = vunpack.c.l.b16 %v390
          %v399 = vunpack.c.l.b16 %v391
          %v400 = vunpack.c.l.b16 %v392
          %v401 = vunpack.c.l.b16 %v393
          %v402 = vpack.c.b16 %v399, %v398
          %v403 = vpack.c.b16 %v401, %v400
          %v407 = vsel %vm375, %v389, 0
          %409 = vmatprep.subr.bf16.mxu0 0
          %410 = vmatpush1.bf16.msra.mxu0 %v402
          %411 = vmatprep.subr.bf16.mxu0 0
          %412 = vmatpush1.bf16.msra.mxu0 %v403
          %413 = vmatprep.subr.bf16.mxu0 0
          %414 = vmatpush1.bf16.msra.mxu0 0
          %415 = vmatprep.subr.bf16.mxu0 0
          %416 = vmatpush1.bf16.msra.mxu0 0
          %417 = vmatprep.subr.bf16.mxu0 0
          %418 = vmatpush1.bf16.msra.mxu0 0
          %419 = vmatprep.subr.bf16.mxu0 0
          %420 = vmatpush1.bf16.msra.mxu0 0
          %421 = vmatprep.subr.bf16.mxu0 0
          %422 = vmatpush1.bf16.msra.mxu0 0
          %423 = vmatprep.subr.bf16.mxu0 0
          %424 = vmatpush1.bf16.msra.mxu0 0
          %425 = vmatprep.subr.bf16.mxu0 0
          %426 = vmatpush1.bf16.msra.mxu0 0
          %427 = vmatprep.subr.bf16.mxu0 0
          %428 = vmatpush1.bf16.msra.mxu0 0
          %429 = vmatprep.subr.bf16.mxu0 0
          %430 = vmatpush1.bf16.msra.mxu0 0
          %431 = vmatprep.subr.bf16.mxu0 0
          %432 = vmatpush1.bf16.msra.mxu0 0
          %433 = vmatprep.subr.bf16.mxu0 0
          %434 = vmatpush1.bf16.msra.mxu0 0
          %435 = vmatprep.subr.bf16.mxu0 0
          %436 = vmatpush1.bf16.msra.mxu0 0
          %437 = vmatprep.subr.bf16.mxu0 0
          %438 = vmatpush1.bf16.msra.mxu0 0
          %439 = vmatprep.subr.bf16.mxu0 0
          %440 = vmatpush1.bf16.msra.mxu0 0
          %441 = vmatprep.mubr.bf16.mxu0 0
          %442 = vmatmul.mubr.bf16.gmra.mrb[0].mxu0 %v407
          %v443 = vpop.f32.mrb[0].mxu0
          %v444 = vadd.f32 0.0, %v443
          %v445 = vpop.f32.mrb[0].mxu0
          %v446 = vpop.f32.mrb[0].mxu0
          %v447 = vpop.f32.mrb[0].mxu0
          %448 = vdwg.mxu0
          %v449 = vpack.c.bf16 %v444, %v444
          %vm450 = vcmask 519168
          %451 = vst.msk [vmem:[#allocation2] sm:$0xf] %vm450, %v449
          %453 = vrot.lane.b32.xlu0 %v444, 64
          %v454 = vpop.permute.xlu0 %453
          %vm456 = vcmask 31744
          %457 = vst.msk [vmem:[#allocation3] sm:$0xff] %vm456, %v454
          %458 = vst.msk [vmem:[#allocation4] sm:$0xff] %vm456, 1.0
          %v459 = vld [vmem:[%s7] sm:$0x1]
          %v461 = vlaneseq
          %v462 = vshrl.u32 %v461, 7
          %v463 = vsub.s32 0, %v462
          %v464 = vrot.slane %v459, %v463
          %vm466 = vcmask 523264
          %467 = vst.msk [vmem:[#allocation5] sm:$0xff] %vm466, %v464
        $region56: #{tpu_custom_call.1} parent=51 // pred_fallthru
          _
        %v468 = vld [vmem:[%s366] sm:$0xff]
        %v469 = vmul.f32 %v468, %v468
        %vm470 = vcmask 261120
        %v471 = vsel %vm470, %v469, 0.0
        %472 = vadd.xlane.f32.xlu0 %v471
        %v473 = vpop.xlane.xlu0 %472
        %v474 = vmax.f32 %v473, 1e-24
        %v475 = vrsqrt.pop %v474
        %v476 = vmul.f32 %v468, %v475
        %v478 = vlaneseq
        %v479 = vshrl.u32 %v478, 7
        %v480 = vsub.s32 0, %v479
        %v481 = vrot.slane %v368, %v480
        %v483 = vmul.f32 %v476, %v481
        %v484 = vpack.c.bf16 %v483, %v483
        %v485 = vld [vmem:[%s5] sm:$0xf]
        %v486 = vld [vmem:[%s5 + $0x4] sm:$0xf]
        %v487 = vld [vmem:[%s5 + $0x8] sm:$0xf]
        %v488 = vld [vmem:[%s5 + $0xc] sm:$0xf]
        %v493 = vunpack.c.l.b16 %v485
        %v494 = vunpack.c.l.b16 %v486
        %v495 = vunpack.c.l.b16 %v487
        %v496 = vunpack.c.l.b16 %v488
        %v497 = vpack.c.b16 %v494, %v493
        %v498 = vpack.c.b16 %v496, %v495
        %v502 = vsel %vm470, %v484, 0
        %504 = vmatprep.subr.bf16.mxu0 0
        %505 = vmatpush1.bf16.msra.mxu0 %v497
        %506 = vmatprep.subr.bf16.mxu0 0
        %507 = vmatpush1.bf16.msra.mxu0 %v498
        %508 = vmatprep.subr.bf16.mxu0 0
        %509 = vmatpush1.bf16.msra.mxu0 0
        %510 = vmatprep.subr.bf16.mxu0 0
        %511 = vmatpush1.bf16.msra.mxu0 0
        %512 = vmatprep.subr.bf16.mxu0 0
        %513 = vmatpush1.bf16.msra.mxu0 0
        %514 = vmatprep.subr.bf16.mxu0 0
        %515 = vmatpush1.bf16.msra.mxu0 0
        %516 = vmatprep.subr.bf16.mxu0 0
        %517 = vmatpush1.bf16.msra.mxu0 0
        %518 = vmatprep.subr.bf16.mxu0 0
        %519 = vmatpush1.bf16.msra.mxu0 0
        %520 = vmatprep.subr.bf16.mxu0 0
        %521 = vmatpush1.bf16.msra.mxu0 0
        %522 = vmatprep.subr.bf16.mxu0 0
        %523 = vmatpush1.bf16.msra.mxu0 0
        %524 = vmatprep.subr.bf16.mxu0 0
        %525 = vmatpush1.bf16.msra.mxu0 0
        %526 = vmatprep.subr.bf16.mxu0 0
        %527 = vmatpush1.bf16.msra.mxu0 0
        %528 = vmatprep.subr.bf16.mxu0 0
        %529 = vmatpush1.bf16.msra.mxu0 0
        %530 = vmatprep.subr.bf16.mxu0 0
        %531 = vmatpush1.bf16.msra.mxu0 0
        %532 = vmatprep.subr.bf16.mxu0 0
        %533 = vmatpush1.bf16.msra.mxu0 0
        %534 = vmatprep.subr.bf16.mxu0 0
        %535 = vmatpush1.bf16.msra.mxu0 0
        %536 = vmatprep.mubr.bf16.mxu0 0
        %537 = vmatmul.mubr.bf16.gmra.mrb[0].mxu0 %v502
        %v538 = vpop.f32.mrb[0].mxu0
        %v539 = vadd.f32 0.0, %v538
        %v540 = vpop.f32.mrb[0].mxu0
        %v541 = vpop.f32.mrb[0].mxu0
        %v542 = vpop.f32.mrb[0].mxu0
        %543 = vdwg.mxu0
        %v544 = vpack.c.bf16 %v539, %v539
        %v545 = vld [vmem:[%s4] sm:$0xf]
        %v546 = vld [vmem:[%s4 + $0x4] sm:$0xf]
        %v547 = vld [vmem:[%s4 + $0x8] sm:$0xf]
        %v548 = vld [vmem:[%s4 + $0xc] sm:$0xf]
        %v549 = vld [vmem:[%s4 + $0x10] sm:$0xf]
        %v550 = vld [vmem:[%s4 + $0x14] sm:$0xf]
        %v551 = vld [vmem:[%s4 + $0x18] sm:$0xf]
        %v552 = vld [vmem:[%s4 + $0x1c] sm:$0xf]
        %v561 = vunpack.c.l.b16 %v545
        %v562 = vunpack.c.l.b16 %v546
        %v563 = vunpack.c.l.b16 %v547
        %v564 = vunpack.c.l.b16 %v548
        %v565 = vunpack.c.l.b16 %v549
        %v566 = vunpack.c.l.b16 %v550
        %v567 = vunpack.c.l.b16 %v551
        %v568 = vunpack.c.l.b16 %v552
        %v569 = vpack.c.b16 %v562, %v561
        %v570 = vpack.c.b16 %v564, %v563
        %v571 = vpack.c.b16 %v566, %v565
        %v572 = vpack.c.b16 %v568, %v567
        %v574 = vsel %vm470, %v569, 0
        %v577 = vsel %vm470, %v570, 0
        %v580 = vsel %vm470, %v571, 0
        %v583 = vsel %vm470, %v572, 0
        %585 = vmatprep.subr.bf16.mxu0 0
        %586 = vmatpush1.bf16.xpose.msra.mxu0 %v502
        %587 = vmatprep.subr.bf16.mxu0 0
        %588 = vmatpush1.bf16.xpose.msra.mxu0 0
        %589 = vmatprep.subr.bf16.mxu0 0
        %590 = vmatpush1.bf16.xpose.msra.mxu0 0
        %591 = vmatprep.subr.bf16.mxu0 0
        %592 = vmatpush1.bf16.xpose.msra.mxu0 0
        %593 = vmatprep.subr.bf16.mxu0 0
        %594 = vmatpush1.bf16.xpose.msra.mxu0 0
        %595 = vmatprep.subr.bf16.mxu0 0
        %596 = vmatpush1.bf16.xpose.msra.mxu0 0
        %597 = vmatprep.subr.bf16.mxu0 0
        %598 = vmatpush1.bf16.xpose.msra.mxu0 0
        %599 = vmatprep.subr.bf16.mxu0 0
        %600 = vmatpush1.bf16.xpose.msra.mxu0 0
        %601 = vmatprep.subr.bf16.mxu0 0
        %602 = vmatpush1.bf16.xpose.msra.mxu0 0
        %603 = vmatprep.subr.bf16.mxu0 0
        %604 = vmatpush1.bf16.xpose.msra.mxu0 0
        %605 = vmatprep.subr.bf16.mxu0 0
        %606 = vmatpush1.bf16.xpose.msra.mxu0 0
        %607 = vmatprep.subr.bf16.mxu0 0
        %608 = vmatpush1.bf16.xpose.msra.mxu0 0
        %609 = vmatprep.subr.bf16.mxu0 0
        %610 = vmatpush1.bf16.xpose.msra.mxu0 0
        %611 = vmatprep.subr.bf16.mxu0 0
        %612 = vmatpush1.bf16.xpose.msra.mxu0 0
        %613 = vmatprep.subr.bf16.mxu0 0
        %614 = vmatpush1.bf16.xpose.msra.mxu0 0
        %615 = vmatprep.subr.bf16.mxu0 0
        %616 = vmatpush1.bf16.xpose.msra.mxu0 0
        %617 = vmatprep.mubr.bf16.mxu0 0
        %618 = vmatmul.mubr.bf16.gmra.mrb[0].mxu0 %v574
        %v619 = vpop.f32.mrb[0].mxu0
        %v620 = vadd.f32 0.0, %v619
        %v621 = vpop.f32.mrb[0].mxu0
        %v622 = vpop.f32.mrb[0].mxu0
        %v623 = vadd.f32 0.0, %v622
        %v624 = vpop.f32.mrb[0].mxu0
        %625 = vmatprep.mubr.bf16.mxu0 0
        %626 = vmatmul.mubr.bf16.gmra.mrb[0].mxu0 %v577
        %v627 = vpop.f32.mrb[0].mxu0
        %v628 = vadd.f32 0.0, %v627
        %v629 = vpop.f32.mrb[0].mxu0
        %v630 = vpop.f32.mrb[0].mxu0
        %v631 = vadd.f32 0.0, %v630
        %v632 = vpop.f32.mrb[0].mxu0
        %633 = vmatprep.mubr.bf16.mxu0 0
        %634 = vmatmul.mubr.bf16.gmra.mrb[0].mxu0 %v580
        %v635 = vpop.f32.mrb[0].mxu0
        %v636 = vadd.f32 0.0, %v635
        %v637 = vpop.f32.mrb[0].mxu0
        %v638 = vpop.f32.mrb[0].mxu0
        %v639 = vadd.f32 0.0, %v638
        %v640 = vpop.f32.mrb[0].mxu0
        %641 = vmatprep.mubr.bf16.mxu0 0
        %642 = vmatmul.mubr.bf16.gmra.mrb[0].mxu0 %v583
        %v643 = vpop.f32.mrb[0].mxu0
        %v644 = vadd.f32 0.0, %v643
        %v645 = vpop.f32.mrb[0].mxu0
        %v646 = vpop.f32.mrb[0].mxu0
        %v647 = vadd.f32 0.0, %v646
        %v648 = vpop.f32.mrb[0].mxu0
        %649 = vdwg.mxu0
        %v650 = vpack.c.bf16 %v623, %v620
        %v651 = vpack.c.bf16 %v631, %v628
        %v652 = vpack.c.bf16 %v639, %v636
        %v653 = vpack.c.bf16 %v647, %v644
        %v654 = vld [vmem:[#allocation2] sm:$0xf]
        %vm655 = vcmask 130048
        %v657 = vsel %vm655, %v654, 0
        %659 = vmatprep.subr.bf16.mxu0 0
        %660 = vmatpush1.bf16.msra.mxu0 %v650
        %661 = vmatprep.subr.bf16.mxu0 0
        %662 = vmatpush1.bf16.msra.mxu0 0
        %663 = vmatprep.subr.bf16.mxu0 0
        %664 = vmatpush1.bf16.msra.mxu0 0
        %665 = vmatprep.subr.bf16.mxu0 0
        %666 = vmatpush1.bf16.msra.mxu0 0
        %667 = vmatprep.subr.bf16.mxu0 0
        %668 = vmatpush1.bf16.msra.mxu0 0
        %669 = vmatprep.subr.bf16.mxu0 0
        %670 = vmatpush1.bf16.msra.mxu0 0
        %671 = vmatprep.subr.bf16.mxu0 0
        %672 = vmatpush1.bf16.msra.mxu0 0
        %673 = vmatprep.subr.bf16.mxu0 0
        %674 = vmatpush1.bf16.msra.mxu0 0
        %675 = vmatprep.subr.bf16.mxu0 0
        %676 = vmatpush1.bf16.msra.mxu0 0
        %677 = vmatprep.subr.bf16.mxu0 0
        %678 = vmatpush1.bf16.msra.mxu0 0
        %679 = vmatprep.subr.bf16.mxu0 0
        %680 = vmatpush1.bf16.msra.mxu0 0
        %681 = vmatprep.subr.bf16.mxu0 0
        %682 = vmatpush1.bf16.msra.mxu0 0
        %683 = vmatprep.subr.bf16.mxu0 0
        %684 = vmatpush1.bf16.msra.mxu0 0
        %685 = vmatprep.subr.bf16.mxu0 0
        %686 = vmatpush1.bf16.msra.mxu0 0
        %687 = vmatprep.subr.bf16.mxu0 0
        %688 = vmatpush1.bf16.msra.mxu0 0
        %689 = vmatprep.subr.bf16.mxu0 0
        %690 = vmatpush1.bf16.msra.mxu0 0
        %691 = vmatprep.mubr.bf16.mxu0 0
        %692 = vmatmul.mubr.bf16.gmra.mrb[0].mxu0 %v657
        %v693 = vpop.f32.mrb[0].mxu0
        %v694 = vadd.f32 0.0, %v693
        %v695 = vpop.f32.mrb[0].mxu0
        %v696 = vpop.f32.mrb[0].mxu0
        %v697 = vpop.f32.mrb[0].mxu0
        %698 = vdwg.mxu0
        %v699 = vld [vmem:[#allocation3] sm:$0xff]
        %v700 = vld [vmem:[#allocation4] sm:$0xff]
        %vm701 = vcmask 64512
        %v702 = vsel %vm701, %v694, -inf
        %703 = vmax.xlane.f32.xlu0 %v702
        %v704 = vpop.xlane.xlu0 %703
        %v705 = vmax.f32 %v699, %v704
        %v706 = vsub.f32 %v699, %v705
        %v707 = vmul.f32 %v706, 1.442695
        %v708 = vpow.pop %v707
        %710 = vset.pattern.permute.xlu0 0
        %711 = vperm.xlu0 %710, %v705
        %v712 = vpop.permute.xlu0 %711
        %v714 = vsub.f32 %v694, %v712
        %v715 = vpack.c.bf16 %v714, %v714
        %v717 = vmul.bf16 %v715, 1069105081
        %v718 = vpow.bf16.pop %v717
        %v719 = vunpack.c.l.bf16 %v718
        %v720 = vsel %vm701, %v719, 0.0
        %721 = vadd.xlane.f32.xlu0 %v720
        %v722 = vpop.xlane.xlu0 %721
        %v723 = vmul.f32 %v708, %v700
        %v724 = vadd.f32 %v723, %v722
        %vm725 = vcmask 7168
        %726 = vst.msk [vmem:[#allocation4] sm:$0xff] %vm725, %v724
        %727 = vst.msk [vmem:[#allocation3] sm:$0xff] %vm725, %v705
        %v729 = vsel %vm701, %v718, 0
        %vm731 = vcmask 1043456
        %v733 = vsel %vm731, %v544, 0
        %735 = vmatprep.subr.bf16.mxu0 0
        %736 = vmatpush1.bf16.msra.mxu0 %v733
        %737 = vmatprep.subr.bf16.mxu0 0
        %738 = vmatpush1.bf16.msra.mxu0 0
        %739 = vmatprep.subr.bf16.mxu0 0
        %740 = vmatpush1.bf16.msra.mxu0 0
        %741 = vmatprep.subr.bf16.mxu0 0
        %742 = vmatpush1.bf16.msra.mxu0 0
        %743 = vmatprep.subr.bf16.mxu0 0
        %744 = vmatpush1.bf16.msra.mxu0 0
        %745 = vmatprep.subr.bf16.mxu0 0
        %746 = vmatpush1.bf16.msra.mxu0 0
        %747 = vmatprep.subr.bf16.mxu0 0
        %748 = vmatpush1.bf16.msra.mxu0 0
        %749 = vmatprep.subr.bf16.mxu0 0
        %750 = vmatpush1.bf16.msra.mxu0 0
        %751 = vmatprep.subr.bf16.mxu0 0
        %752 = vmatpush1.bf16.msra.mxu0 0
        %753 = vmatprep.subr.bf16.mxu0 0
        %754 = vmatpush1.bf16.msra.mxu0 0
        %755 = vmatprep.subr.bf16.mxu0 0
        %756 = vmatpush1.bf16.msra.mxu0 0
        %757 = vmatprep.subr.bf16.mxu0 0
        %758 = vmatpush1.bf16.msra.mxu0 0
        %759 = vmatprep.subr.bf16.mxu0 0
        %760 = vmatpush1.bf16.msra.mxu0 0
        %761 = vmatprep.subr.bf16.mxu0 0
        %762 = vmatpush1.bf16.msra.mxu0 0
        %763 = vmatprep.subr.bf16.mxu0 0
        %764 = vmatpush1.bf16.msra.mxu0 0
        %765 = vmatprep.subr.bf16.mxu0 0
        %766 = vmatpush1.bf16.msra.mxu0 0
        %767 = vmatprep.mubr.bf16.mxu0 0
        %768 = vmatmul.mubr.bf16.gmra.mrb[0].mxu0 %v729
        %v769 = vpop.f32.mrb[0].mxu0
        %v770 = vadd.f32 0.0, %v769
        %v771 = vpop.f32.mrb[0].mxu0
        %v772 = vpop.f32.mrb[0].mxu0
        %v773 = vpop.f32.mrb[0].mxu0
        %774 = vdwg.mxu0
        %v775 = vld [vmem:[#allocation5] sm:$0xff]
        %777 = vset.pattern.permute.xlu0 0
        %778 = vperm.xlu0 %777, %v708
        %v779 = vpop.permute.xlu0 %778
        %v781 = vmul.f32 %v779, %v775
        %v782 = vadd.f32 %v781, %v770
        %783 = vst.msk [vmem:[#allocation5] sm:$0xff] %vm655, %v782
        %v784 = vld [vmem:[#allocation2] sm:$0xf]
        %v786 = vunpack.c.l.b16 %v784
        %v787 = vpack.c.b16 %v786, %v786
        %788 = vrot.lane.b32.xlu0 %v787, 112
        %v789 = vpop.permute.xlu0 %788
        %v791 = vsel %vm655, %v789, 0
        %793 = vmatprep.subr.bf16.mxu0 0
        %794 = vmatpush1.bf16.msra.mxu0 %v651
        %795 = vmatprep.subr.bf16.mxu0 0
        %796 = vmatpush1.bf16.msra.mxu0 0
        %797 = vmatprep.subr.bf16.mxu0 0
        %798 = vmatpush1.bf16.msra.mxu0 0
        %799 = vmatprep.subr.bf16.mxu0 0
        %800 = vmatpush1.bf16.msra.mxu0 0
        %801 = vmatprep.subr.bf16.mxu0 0
        %802 = vmatpush1.bf16.msra.mxu0 0
        %803 = vmatprep.subr.bf16.mxu0 0
        %804 = vmatpush1.bf16.msra.mxu0 0
        %805 = vmatprep.subr.bf16.mxu0 0
        %806 = vmatpush1.bf16.msra.mxu0 0
        %807 = vmatprep.subr.bf16.mxu0 0
        %808 = vmatpush1.bf16.msra.mxu0 0
        %809 = vmatprep.subr.bf16.mxu0 0
        %810 = vmatpush1.bf16.msra.mxu0 0
        %811 = vmatprep.subr.bf16.mxu0 0
        %812 = vmatpush1.bf16.msra.mxu0 0
        %813 = vmatprep.subr.bf16.mxu0 0
        %814 = vmatpush1.bf16.msra.mxu0 0
        %815 = vmatprep.subr.bf16.mxu0 0
        %816 = vmatpush1.bf16.msra.mxu0 0
        %817 = vmatprep.subr.bf16.mxu0 0
        %818 = vmatpush1.bf16.msra.mxu0 0
        %819 = vmatprep.subr.bf16.mxu0 0
        %820 = vmatpush1.bf16.msra.mxu0 0
        %821 = vmatprep.subr.bf16.mxu0 0
        %822 = vmatpush1.bf16.msra.mxu0 0
        %823 = vmatprep.subr.bf16.mxu0 0
        %824 = vmatpush1.bf16.msra.mxu0 0
        %825 = vmatprep.mubr.bf16.mxu0 0
        %826 = vmatmul.mubr.bf16.gmra.mrb[0].mxu0 %v791
        %v827 = vpop.f32.mrb[0].mxu0
        %v828 = vadd.f32 0.0, %v827
        %v829 = vpop.f32.mrb[0].mxu0
        %v830 = vpop.f32.mrb[0].mxu0
        %v831 = vpop.f32.mrb[0].mxu0
        %832 = vdwg.mxu0
        %v833 = vld [vmem:[#allocation3] sm:$0xff]
        %v834 = vld [vmem:[#allocation4] sm:$0xff]
        %v835 = vsel %vm701, %v828, -inf
        %836 = vmax.xlane.f32.xlu0 %v835
        %v837 = vpop.xlane.xlu0 %836
        %v838 = vmax.f32 %v833, %v837
        %v839 = vsub.f32 %v833, %v838
        %v840 = vmul.f32 %v839, 1.442695
        %v841 = vpow.pop %v840
        %843 = vset.pattern.permute.xlu0 1
        %844 = vperm.xlu0 %843, %v838
        %v845 = vpop.permute.xlu0 %844
        %v847 = vsub.f32 %v828, %v845
        %v848 = vpack.c.bf16 %v847, %v847
        %v850 = vmul.bf16 %v848, 1069105081
        %v851 = vpow.bf16.pop %v850
        %v852 = vunpack.c.l.bf16 %v851
        %v853 = vsel %vm701, %v852, 0.0
        %854 = vadd.xlane.f32.xlu0 %v853
        %v855 = vpop.xlane.xlu0 %854
        %v856 = vmul.f32 %v841, %v834
        %v857 = vadd.f32 %v856, %v855
        %vm858 = vcmask 15368
        %859 = vst.msk [vmem:[#allocation4] sm:$0xff] %vm858, %v857
        %860 = vst.msk [vmem:[#allocation3] sm:$0xff] %vm858, %v838
        %862 = vrot.lane.b32.xlu0 %v544, 112
        %v863 = vpop.permute.xlu0 %862
        %v865 = vsel %vm701, %v851, 0
        %v868 = vsel %vm731, %v863, 0
        %870 = vmatprep.subr.bf16.mxu0 0
        %871 = vmatpush1.bf16.msra.mxu0 %v868
        %872 = vmatprep.subr.bf16.mxu0 0
        %873 = vmatpush1.bf16.msra.mxu0 0
        %874 = vmatprep.subr.bf16.mxu0 0
        %875 = vmatpush1.bf16.msra.mxu0 0
        %876 = vmatprep.subr.bf16.mxu0 0
        %877 = vmatpush1.bf16.msra.mxu0 0
        %878 = vmatprep.subr.bf16.mxu0 0
        %879 = vmatpush1.bf16.msra.mxu0 0
        %880 = vmatprep.subr.bf16.mxu0 0
        %881 = vmatpush1.bf16.msra.mxu0 0
        %882 = vmatprep.subr.bf16.mxu0 0
        %883 = vmatpush1.bf16.msra.mxu0 0
        %884 = vmatprep.subr.bf16.mxu0 0
        %885 = vmatpush1.bf16.msra.mxu0 0
        %886 = vmatprep.subr.bf16.mxu0 0
        %887 = vmatpush1.bf16.msra.mxu0 0
        %888 = vmatprep.subr.bf16.mxu0 0
        %889 = vmatpush1.bf16.msra.mxu0 0
        %890 = vmatprep.subr.bf16.mxu0 0
        %891 = vmatpush1.bf16.msra.mxu0 0
        %892 = vmatprep.subr.bf16.mxu0 0
        %893 = vmatpush1.bf16.msra.mxu0 0
        %894 = vmatprep.subr.bf16.mxu0 0
        %895 = vmatpush1.bf16.msra.mxu0 0
        %896 = vmatprep.subr.bf16.mxu0 0
        %897 = vmatpush1.bf16.msra.mxu0 0
        %898 = vmatprep.subr.bf16.mxu0 0
        %899 = vmatpush1.bf16.msra.mxu0 0
        %900 = vmatprep.subr.bf16.mxu0 0
        %901 = vmatpush1.bf16.msra.mxu0 0
        %902 = vmatprep.mubr.bf16.mxu0 0
        %903 = vmatmul.mubr.bf16.gmra.mrb[0].mxu0 %v865
        %v904 = vpop.f32.mrb[0].mxu0
        %v905 = vadd.f32 0.0, %v904
        %v906 = vpop.f32.mrb[0].mxu0
        %v907 = vpop.f32.mrb[0].mxu0
        %v908 = vpop.f32.mrb[0].mxu0
        %909 = vdwg.mxu0
        %v910 = vld [vmem:[#allocation5] sm:$0xff]
        %912 = vset.pattern.permute.xlu0 1
        %913 = vperm.xlu0 %912, %v841
        %v914 = vpop.permute.xlu0 %913
        %v916 = vmul.f32 %v914, %v910
        %918 = vrot.lane.b32.xlu0 %v905, 16
        %v919 = vpop.permute.xlu0 %918
        %v921 = vadd.f32 %v916, %v919
        %vm922 = vcmask 261248
        %923 = vst.msk [vmem:[#allocation5] sm:$0xff] %vm922, %v921
        %v924 = vld [vmem:[#allocation2] sm:$0xf]
        %v926 = vunpack.c.l.b16 %v924
        %v927 = vpack.c.b16 %v926, %v926
        %928 = vrot.lane.b32.xlu0 %v927, 96
        %v929 = vpop.permute.xlu0 %928
        %v931 = vsel %vm655, %v929, 0
        %933 = vmatprep.subr.bf16.mxu0 0
        %934 = vmatpush1.bf16.msra.mxu0 %v652
        %935 = vmatprep.subr.bf16.mxu0 0
        %936 = vmatpush1.bf16.msra.mxu0 0
        %937 = vmatprep.subr.bf16.mxu0 0
        %938 = vmatpush1.bf16.msra.mxu0 0
        %939 = vmatprep.subr.bf16.mxu0 0
        %940 = vmatpush1.bf16.msra.mxu0 0
        %941 = vmatprep.subr.bf16.mxu0 0
        %942 = vmatpush1.bf16.msra.mxu0 0
        %943 = vmatprep.subr.bf16.mxu0 0
        %944 = vmatpush1.bf16.msra.mxu0 0
        %945 = vmatprep.subr.bf16.mxu0 0
        %946 = vmatpush1.bf16.msra.mxu0 0
        %947 = vmatprep.subr.bf16.mxu0 0
        %948 = vmatpush1.bf16.msra.mxu0 0
        %949 = vmatprep.subr.bf16.mxu0 0
        %950 = vmatpush1.bf16.msra.mxu0 0
        %951 = vmatprep.subr.bf16.mxu0 0
        %952 = vmatpush1.bf16.msra.mxu0 0
        %953 = vmatprep.subr.bf16.mxu0 0
        %954 = vmatpush1.bf16.msra.mxu0 0
        %955 = vmatprep.subr.bf16.mxu0 0
        %956 = vmatpush1.bf16.msra.mxu0 0
        %957 = vmatprep.subr.bf16.mxu0 0
        %958 = vmatpush1.bf16.msra.mxu0 0
        %959 = vmatprep.subr.bf16.mxu0 0
        %960 = vmatpush1.bf16.msra.mxu0 0
        %961 = vmatprep.subr.bf16.mxu0 0
        %962 = vmatpush1.bf16.msra.mxu0 0
        %963 = vmatprep.subr.bf16.mxu0 0
        %964 = vmatpush1.bf16.msra.mxu0 0
        %965 = vmatprep.mubr.bf16.mxu0 0
        %966 = vmatmul.mubr.bf16.gmra.mrb[0].mxu0 %v931
        %v967 = vpop.f32.mrb[0].mxu0
        %v968 = vadd.f32 0.0, %v967
        %v969 = vpop.f32.mrb[0].mxu0
        %v970 = vpop.f32.mrb[0].mxu0
        %v971 = vpop.f32.mrb[0].mxu0
        %972 = vdwg.mxu0
        %v973 = vld [vmem:[#allocation3] sm:$0xff]
        %v974 = vld [vmem:[#allocation4] sm:$0xff]
        %v975 = vsel %vm701, %v968, -inf
        %976 = vmax.xlane.f32.xlu0 %v975
        %v977 = vpop.xlane.xlu0 %976
        %v978 = vmax.f32 %v973, %v977
        %v979 = vsub.f32 %v973, %v978
        %v980 = vmul.f32 %v979, 1.442695
        %v981 = vpow.pop %v980
        %983 = vset.pattern.permute.xlu0 2
        %984 = vperm.xlu0 %983, %v978
        %v985 = vpop.permute.xlu0 %984
        %v987 = vsub.f32 %v968, %v985
        %v988 = vpack.c.bf16 %v987, %v987
        %v990 = vmul.bf16 %v988, 1069105081
        %v991 = vpow.bf16.pop %v990
        %v992 = vunpack.c.l.bf16 %v991
        %v993 = vsel %vm701, %v992, 0.0
        %994 = vadd.xlane.f32.xlu0 %v993
        %v995 = vpop.xlane.xlu0 %994
        %v996 = vmul.f32 %v981, %v974
        %v997 = vadd.f32 %v996, %v995
        %vm998 = vcmask 23568
        %999 = vst.msk [vmem:[#allocation4] sm:$0xff] %vm998, %v997
        %1000 = vst.msk [vmem:[#allocation3] sm:$0xff] %vm998, %v978
        %1001 = vrot.lane.b32.xlu0 %v544, 96
        %v1002 = vpop.permute.xlu0 %1001
        %v1004 = vsel %vm701, %v991, 0
        %v1007 = vsel %vm731, %v1002, 0
        %1009 = vmatprep.subr.bf16.mxu0 0
        %1010 = vmatpush1.bf16.msra.mxu0 %v1007
        %1011 = vmatprep.subr.bf16.mxu0 0
        %1012 = vmatpush1.bf16.msra.mxu0 0
        %1013 = vmatprep.subr.bf16.mxu0 0
        %1014 = vmatpush1.bf16.msra.mxu0 0
        %1015 = vmatprep.subr.bf16.mxu0 0
        %1016 = vmatpush1.bf16.msra.mxu0 0
        %1017 = vmatprep.subr.bf16.mxu0 0
        %1018 = vmatpush1.bf16.msra.mxu0 0
        %1019 = vmatprep.subr.bf16.mxu0 0
        %1020 = vmatpush1.bf16.msra.mxu0 0
        %1021 = vmatprep.subr.bf16.mxu0 0
        %1022 = vmatpush1.bf16.msra.mxu0 0
        %1023 = vmatprep.subr.bf16.mxu0 0
        %1024 = vmatpush1.bf16.msra.mxu0 0
        %1025 = vmatprep.subr.bf16.mxu0 0
        %1026 = vmatpush1.bf16.msra.mxu0 0
        %1027 = vmatprep.subr.bf16.mxu0 0
        %1028 = vmatpush1.bf16.msra.mxu0 0
        %1029 = vmatprep.subr.bf16.mxu0 0
        %1030 = vmatpush1.bf16.msra.mxu0 0
        %1031 = vmatprep.subr.bf16.mxu0 0
        %1032 = vmatpush1.bf16.msra.mxu0 0
        %1033 = vmatprep.subr.bf16.mxu0 0
        %1034 = vmatpush1.bf16.msra.mxu0 0
        %1035 = vmatprep.subr.bf16.mxu0 0
        %1036 = vmatpush1.bf16.msra.mxu0 0
        %1037 = vmatprep.subr.bf16.mxu0 0
        %1038 = vmatpush1.bf16.msra.mxu0 0
        %1039 = vmatprep.subr.bf16.mxu0 0
        %1040 = vmatpush1.bf16.msra.mxu0 0
        %1041 = vmatprep.mubr.bf16.mxu0 0
        %1042 = vmatmul.mubr.bf16.gmra.mrb[0].mxu0 %v1004
        %v1043 = vpop.f32.mrb[0].mxu0
        %v1044 = vadd.f32 0.0, %v1043
        %v1045 = vpop.f32.mrb[0].mxu0
        %v1046 = vpop.f32.mrb[0].mxu0
        %v1047 = vpop.f32.mrb[0].mxu0
        %1048 = vdwg.mxu0
        %v1049 = vld [vmem:[#allocation5] sm:$0xff]
        %1051 = vset.pattern.permute.xlu0 2
        %1052 = vperm.xlu0 %1051, %v981
        %v1053 = vpop.permute.xlu0 %1052
        %v1055 = vmul.f32 %v1053, %v1049
        %1057 = vrot.lane.b32.xlu0 %v1044, 32
        %v1058 = vpop.permute.xlu0 %1057
        %v1060 = vadd.f32 %v1055, %v1058
        %vm1061 = vcmask 392448
        %1062 = vst.msk [vmem:[#allocation5] sm:$0xff] %vm1061, %v1060
        %v1063 = vld [vmem:[#allocation2] sm:$0xf]
        %v1065 = vunpack.c.l.b16 %v1063
        %v1066 = vpack.c.b16 %v1065, %v1065
        %1067 = vrot.lane.b32.xlu0 %v1066, 80
        %v1068 = vpop.permute.xlu0 %1067
        %v1070 = vsel %vm655, %v1068, 0
        %1072 = vmatprep.subr.bf16.mxu0 0
        %1073 = vmatpush1.bf16.msra.mxu0 %v653
        %1074 = vmatprep.subr.bf16.mxu0 0
        %1075 = vmatpush1.bf16.msra.mxu0 0
        %1076 = vmatprep.subr.bf16.mxu0 0
        %1077 = vmatpush1.bf16.msra.mxu0 0
        %1078 = vmatprep.subr.bf16.mxu0 0
        %1079 = vmatpush1.bf16.msra.mxu0 0
        %1080 = vmatprep.subr.bf16.mxu0 0
        %1081 = vmatpush1.bf16.msra.mxu0 0
        %1082 = vmatprep.subr.bf16.mxu0 0
        %1083 = vmatpush1.bf16.msra.mxu0 0
        %1084 = vmatprep.subr.bf16.mxu0 0
        %1085 = vmatpush1.bf16.msra.mxu0 0
        %1086 = vmatprep.subr.bf16.mxu0 0
        %1087 = vmatpush1.bf16.msra.mxu0 0
        %1088 = vmatprep.subr.bf16.mxu0 0
        %1089 = vmatpush1.bf16.msra.mxu0 0
        %1090 = vmatprep.subr.bf16.mxu0 0
        %1091 = vmatpush1.bf16.msra.mxu0 0
        %1092 = vmatprep.subr.bf16.mxu0 0
        %1093 = vmatpush1.bf16.msra.mxu0 0
        %1094 = vmatprep.subr.bf16.mxu0 0
        %1095 = vmatpush1.bf16.msra.mxu0 0
        %1096 = vmatprep.subr.bf16.mxu0 0
        %1097 = vmatpush1.bf16.msra.mxu0 0
        %1098 = vmatprep.subr.bf16.mxu0 0
        %1099 = vmatpush1.bf16.msra.mxu0 0
        %1100 = vmatprep.subr.bf16.mxu0 0
        %1101 = vmatpush1.bf16.msra.mxu0 0
        %1102 = vmatprep.subr.bf16.mxu0 0
        %1103 = vmatpush1.bf16.msra.mxu0 0
        %1104 = vmatprep.mubr.bf16.mxu0 0
        %1105 = vmatmul.mubr.bf16.gmra.mrb[0].mxu0 %v1070
        %v1106 = vpop.f32.mrb[0].mxu0
        %v1107 = vadd.f32 0.0, %v1106
        %v1108 = vpop.f32.mrb[0].mxu0
        %v1109 = vpop.f32.mrb[0].mxu0
        %v1110 = vpop.f32.mrb[0].mxu0
        %1111 = vdwg.mxu0
        %v1112 = vld [vmem:[#allocation3] sm:$0xff]
        %v1113 = vld [vmem:[#allocation4] sm:$0xff]
        %v1114 = vsel %vm701, %v1107, -inf
        %1115 = vmax.xlane.f32.xlu0 %v1114
        %v1116 = vpop.xlane.xlu0 %1115
        %v1117 = vmax.f32 %v1112, %v1116
        %v1118 = vsub.f32 %v1112, %v1117
        %v1119 = vmul.f32 %v1118, 1.442695
        %v1120 = vpow.pop %v1119
        %1122 = vset.pattern.permute.xlu0 3
        %1123 = vperm.xlu0 %1122, %v1117
        %v1124 = vpop.permute.xlu0 %1123
        %v1126 = vsub.f32 %v1107, %v1124
        %v1127 = vpack.c.bf16 %v1126, %v1126
        %v1129 = vmul.bf16 %v1127, 1069105081
        %v1130 = vpow.bf16.pop %v1129
        %v1131 = vunpack.c.l.bf16 %v1130
        %v1132 = vsel %vm701, %v1131, 0.0
        %1133 = vadd.xlane.f32.xlu0 %v1132
        %v1134 = vpop.xlane.xlu0 %1133
        %v1135 = vmul.f32 %v1120, %v1113
        %v1136 = vadd.f32 %v1135, %v1134
        %vm1137 = vcmask 31768
        %1138 = vst.msk [vmem:[#allocation4] sm:$0xff] %vm1137, %v1136
        %1139 = vst.msk [vmem:[#allocation3] sm:$0xff] %vm1137, %v1117
        %1140 = vrot.lane.b32.xlu0 %v544, 80
        %v1141 = vpop.permute.xlu0 %1140
        %v1143 = vsel %vm701, %v1130, 0
        %v1146 = vsel %vm731, %v1141, 0
        %1148 = vmatprep.subr.bf16.mxu0 0
        %1149 = vmatpush1.bf16.msra.mxu0 %v1146
        %1150 = vmatprep.subr.bf16.mxu0 0
        %1151 = vmatpush1.bf16.msra.mxu0 0
        %1152 = vmatprep.subr.bf16.mxu0 0
        %1153 = vmatpush1.bf16.msra.mxu0 0
        %1154 = vmatprep.subr.bf16.mxu0 0
        %1155 = vmatpush1.bf16.msra.mxu0 0
        %1156 = vmatprep.subr.bf16.mxu0 0
        %1157 = vmatpush1.bf16.msra.mxu0 0
        %1158 = vmatprep.subr.bf16.mxu0 0
        %1159 = vmatpush1.bf16.msra.mxu0 0
        %1160 = vmatprep.subr.bf16.mxu0 0
        %1161 = vmatpush1.bf16.msra.mxu0 0
        %1162 = vmatprep.subr.bf16.mxu0 0
        %1163 = vmatpush1.bf16.msra.mxu0 0
        %1164 = vmatprep.subr.bf16.mxu0 0
        %1165 = vmatpush1.bf16.msra.mxu0 0
        %1166 = vmatprep.subr.bf16.mxu0 0
        %1167 = vmatpush1.bf16.msra.mxu0 0
        %1168 = vmatprep.subr.bf16.mxu0 0
        %1169 = vmatpush1.bf16.msra.mxu0 0
        %1170 = vmatprep.subr.bf16.mxu0 0
        %1171 = vmatpush1.bf16.msra.mxu0 0
        %1172 = vmatprep.subr.bf16.mxu0 0
        %1173 = vmatpush1.bf16.msra.mxu0 0
        %1174 = vmatprep.subr.bf16.mxu0 0
        %1175 = vmatpush1.bf16.msra.mxu0 0
        %1176 = vmatprep.subr.bf16.mxu0 0
        %1177 = vmatpush1.bf16.msra.mxu0 0
        %1178 = vmatprep.subr.bf16.mxu0 0
        %1179 = vmatpush1.bf16.msra.mxu0 0
        %1180 = vmatprep.mubr.bf16.mxu0 0
        %1181 = vmatmul.mubr.bf16.gmra.mrb[0].mxu0 %v1143
        %v1182 = vpop.f32.mrb[0].mxu0
        %v1183 = vadd.f32 0.0, %v1182
        %v1184 = vpop.f32.mrb[0].mxu0
        %v1185 = vpop.f32.mrb[0].mxu0
        %v1186 = vpop.f32.mrb[0].mxu0
        %1187 = vdwg.mxu0
        %v1188 = vld [vmem:[#allocation5] sm:$0xff]
        %1190 = vset.pattern.permute.xlu0 3
        %1191 = vperm.xlu0 %1190, %v1120
        %v1192 = vpop.permute.xlu0 %1191
        %v1194 = vmul.f32 %v1192, %v1188
        %1196 = vrot.lane.b32.xlu0 %v1183, 48
        %v1197 = vpop.permute.xlu0 %1196
        %v1199 = vadd.f32 %v1194, %v1197
        %vm1200 = vcmask 523648
        %1201 = vst.msk [vmem:[#allocation5] sm:$0xff] %vm1200, %v1199
        %p1202 = scmp.eq.s32.totalorder %s29, 1
        // Predicated region
        $region57: #{tpu_custom_call.1} parent=51 // pred_check
          %p1203 = pneg %p1202
        $region58: #{tpu_custom_call.1} parent=51 // pred_check_branch
          %1205 = sbr.rel (%p1203) target = $region60
        $region59: #{tpu_custom_call.1} parent=51 // pred_region
          %v1206 = vld [vmem:[#allocation4] sm:$0xff]
          %v1207 = vrcp.pop %v1206
          %v1208 = vld [vmem:[#allocation5] sm:$0xff]
          %1210 = vset.pattern.permute.xlu0 0
          %1211 = vperm.xlu0 %1210, %v1207
          %v1212 = vpop.permute.xlu0 %1211
          %v1214 = vmul.f32 %v1208, %v1212
          %v1215 = vpack.c.bf16 %v1214, %v1214
          %1216 = vset.pattern.permute.xlu0 1
          %1217 = vperm.xlu0 %1216, %v1207
          %v1218 = vpop.permute.xlu0 %1217
          %v1220 = vmul.f32 %v1208, %v1218
          %v1221 = vpack.c.bf16 %v1220, %v1220
          %1222 = vset.pattern.permute.xlu0 2
          %1223 = vperm.xlu0 %1222, %v1207
          %v1224 = vpop.permute.xlu0 %1223
          %v1226 = vmul.f32 %v1208, %v1224
          %v1227 = vpack.c.bf16 %v1226, %v1226
          %1228 = vset.pattern.permute.xlu0 3
          %1229 = vperm.xlu0 %1228, %v1207
          %v1230 = vpop.permute.xlu0 %1229
          %v1232 = vmul.f32 %v1208, %v1230
          %v1233 = vpack.c.bf16 %v1232, %v1232
          %v1236 = vsel %vm655, %v1215, %v1221
          %v1238 = vsel %vm470, %v1236, %v1227
          %vm1239 = vcmask 392192
          %v1241 = vsel %vm1239, %v1238, %v1233
          %v1242 = vld [vmem:[%s6] sm:$0xf]
          %v1243 = vld [vmem:[%s6 + $0x4] sm:$0xf]
          %v1244 = vld [vmem:[%s6 + $0x8] sm:$0xf]
          %v1245 = vld [vmem:[%s6 + $0xc] sm:$0xf]
          %v1246 = vld [vmem:[%s6 + $0x10] sm:$0xf]
          %v1247 = vld [vmem:[%s6 + $0x14] sm:$0xf]
          %v1248 = vld [vmem:[%s6 + $0x18] sm:$0xf]
          %v1249 = vld [vmem:[%s6 + $0x1c] sm:$0xf]
          %v1258 = vunpack.c.l.b16 %v1242
          %v1259 = vunpack.c.l.b16 %v1243
          %v1260 = vunpack.c.l.b16 %v1244
          %v1261 = vunpack.c.l.b16 %v1245
          %v1262 = vunpack.c.l.b16 %v1246
          %v1263 = vunpack.c.l.b16 %v1247
          %v1264 = vunpack.c.l.b16 %v1248
          %v1265 = vunpack.c.l.b16 %v1249
          %v1266 = vpack.c.b16 %v1259, %v1258
          %v1267 = vpack.c.b16 %v1261, %v1260
          %v1268 = vpack.c.b16 %v1263, %v1262
          %v1269 = vpack.c.b16 %v1265, %v1264
          %vm1274 = vcmask 523264
          %v1275 = vsel %vm1274, %v1241, 0
          %1277 = vmatprep.subr.bf16.mxu0 0
          %1278 = vmatpush1.bf16.msra.mxu0 %v1266
          %1279 = vmatprep.subr.bf16.mxu0 0
          %1280 = vmatpush1.bf16.msra.mxu0 %v1267
          %1281 = vmatprep.subr.bf16.mxu0 0
          %1282 = vmatpush1.bf16.msra.mxu0 %v1268
          %1283 = vmatprep.subr.bf16.mxu0 0
          %1284 = vmatpush1.bf16.msra.mxu0 %v1269
          %1285 = vmatprep.subr.bf16.mxu0 0
          %1286 = vmatpush1.bf16.msra.mxu0 0
          %1287 = vmatprep.subr.bf16.mxu0 0
          %1288 = vmatpush1.bf16.msra.mxu0 0
          %1289 = vmatprep.subr.bf16.mxu0 0
          %1290 = vmatpush1.bf16.msra.mxu0 0
          %1291 = vmatprep.subr.bf16.mxu0 0
          %1292 = vmatpush1.bf16.msra.mxu0 0
          %1293 = vmatprep.subr.bf16.mxu0 0
          %1294 = vmatpush1.bf16.msra.mxu0 0
          %1295 = vmatprep.subr.bf16.mxu0 0
          %1296 = vmatpush1.bf16.msra.mxu0 0
          %1297 = vmatprep.subr.bf16.mxu0 0
          %1298 = vmatpush1.bf16.msra.mxu0 0
          %1299 = vmatprep.subr.bf16.mxu0 0
          %1300 = vmatpush1.bf16.msra.mxu0 0
          %1301 = vmatprep.subr.bf16.mxu0 0
          %1302 = vmatpush1.bf16.msra.mxu0 0
          %1303 = vmatprep.subr.bf16.mxu0 0
          %1304 = vmatpush1.bf16.msra.mxu0 0
          %1305 = vmatprep.subr.bf16.mxu0 0
          %1306 = vmatpush1.bf16.msra.mxu0 0
          %1307 = vmatprep.subr.bf16.mxu0 0
          %1308 = vmatpush1.bf16.msra.mxu0 0
          %1309 = vmatprep.mubr.bf16.mxu0 0
          %1310 = vmatmul.mubr.bf16.gmra.mrb[0].mxu0 %v1275
          %v1311 = vpop.f32.mrb[0].mxu0
          %v1312 = vadd.f32 0.0, %v1311
          %v1313 = vpop.f32.mrb[0].mxu0
          %v1314 = vpop.f32.mrb[0].mxu0
          %v1315 = vpop.f32.mrb[0].mxu0
          %1316 = vdwg.mxu0
          %1317 = vst.msk [vmem:[%s350] sm:$0xff] %vm470, %v1312
        $region60: #{tpu_custom_call.1} parent=51 // pred_fallthru
          _
        %s1318 = sand.u32 %s233, 1
        %s1319 = scalar_lea.sflag [#allocation7], %s1318
        %s1320 = sand.u32 %s233, 1
        %s1321 = smul.addr %s1320, 8
        %s1322 = scalar_lea.vmem [#allocation6], %s1321
        // Predicated region
        $region61: #{tpu_custom_call.1} parent=51 // pred_check
          %p1323 = pneg %p243
        $region62: #{tpu_custom_call.1} parent=51 // pred_check_branch
          %1325 = sbr.rel (%p1323) target = $region64
        $region63: #{tpu_custom_call.1} parent=51 // pred_region
          %s1327 = ssub.s32 128, 128
          %1328 = vsyncadd %s1319, %s1327
          %s1329 = smul.addr %s27, 2
          %s1330 = sadd.s32 %s28, %s1329
          %s1331 = smul.addr %s1330, 128
          %s1332 = scalar_lea.hbm %s8, %s1331
          %s1334 = sshll.u32 %s1322, 4
          %s1335 = int_to_ptr.vmem [resolvable:$true] %s1334
          %1337 = dma.vmem_to_hbm [thread:$0]  %s1335, 128, %s1332, %s1319
        $region64: #{tpu_custom_call.1} parent=51 // pred_fallthru
          _
      $region52: #{tpu_custom_call.1} parent=5 // pred_fallthru
        _
      %p1338 = scmp.le.s32.totalorder 2, %s17
      // Predicated region
      $region65: #{tpu_custom_call.1} parent=5 // pred_check
        %p1339 = pneg %p1338
      $region66: #{tpu_custom_call.1} parent=5 // pred_check_branch
        %1341 = sbr.rel (%p1339) target = $region68
      $region67: #{tpu_custom_call.1} parent=5 // pred_region
        %s1342 = ssub.s32 %s17, 2
        // Predicated region
        $region69: #{tpu_custom_call.1} parent=67 // pred_check
          %p1343 = pneg %p249
        $region70: #{tpu_custom_call.1} parent=67 // pred_check_branch
          %1345 = sbr.rel (%p1343) target = $region72
        $region71: #{tpu_custom_call.1} parent=67 // pred_region
          %s1346 = sand.u32 %s234, 1
          %s1347 = scalar_lea.sflag [#allocation7], %s1346
          %s1348 = sand.u32 %s234, 1
          %s1349 = smul.addr %s1348, 8
          %s1350 = scalar_lea.vmem [#allocation6], %s1349
          %1351 = dma.done %s1347, 128
        $region72: #{tpu_custom_call.1} parent=67 // pred_fallthru
          _
      $region68: #{tpu_custom_call.1} parent=5 // pred_fallthru
        _
    $region6: #{tpu_custom_call.1} parent=1 // loop_footer
      %s21 = sadd.s32 1, %s17
    $region7: #{tpu_custom_call.1} parent=1 // loop_footer_branch
      %16 = sbr.rel target = $region3
    $region8: #{tpu_custom_call.1} parent=1 // loop_exit
      _
    %1352 = vsyncpa [#allocation7], 1
    %s1353 = scalar_lea.sflag [#allocation7], 1
    %1354 = vsyncpa %s1353, 1

</llo_original>
